<compile_context>
chip_gen: v5e
topology: v5e:2x2
jax: 0.10.0
libtpu: 0.0.40
codegen_flags: <defaults>
</compile_context>

<pallas_src>
import jax
import jax.numpy as jnp
from jax import lax
from jax.experimental import pallas as pl
from jax.experimental.pallas import tpu as pltpu


# ----------------------------------------------------------------------------
# fused kernel: one grid step == one GRU layer; layer-0 step also runs the
# hypergraph convolutions + (host-gathered) embedding.
# ----------------------------------------------------------------------------
def fused_hhltraj_kernel(g_ref, gg_ref, x0_ref, w1_ref, b1_ref, w2_ref, b2_ref,
                         len_ref, wih_ref, whh_ref, bgi_ref, bhn_ref,
                         out_ref, emb_ref, xin_ref, gi_ref):
    f32 = jnp.float32
    bf16 = jnp.bfloat16
    TB, H = emb_ref.shape            # TB = T * Bp
    Bp = len_ref.shape[0]
    T = TB // Bp
    l = pl.program_id(0)
    L = pl.num_programs(0)

    # ---- prologue (layer 0 only): HGNN conv x2 + host-gathered embedding ----
    @pl.when(l == 0)
    def _():
        x0 = x0_ref[...]                                               # (N, H) bf16
        t1 = (jnp.dot(x0, w1_ref[...], preferred_element_type=f32)
              + b1_ref[...])                                           # (N, H) f32
        h1 = jnp.dot(g_ref[...], t1.astype(bf16),
                     preferred_element_type=f32)                       # G @ (x0 W1 + b1)
        x1 = jnp.maximum(h1, 0.0) + x0.astype(f32)                     # relu + residual
        t2 = (jnp.dot(x1.astype(bf16), w2_ref[...],
                      preferred_element_type=f32) + b2_ref[...])       # (N, H) f32
        # emb[t*Bp + b] = G[data[b,t]] @ (x1 W2 + b2)  ==  x2[data[b,t]]
        emb = jnp.dot(gg_ref[...], t2.astype(bf16),
                      preferred_element_type=f32)                      # (TB, H)
        emb_ref[...] = emb
        xin_ref[...] = emb

    # ---- one GRU layer per grid step (PyTorch gate order r, z, n) ----
    wih = wih_ref[0]                                                   # (H, 3H) bf16
    whh = whh_ref[0]                                                   # (H, 3H) bf16
    bgi = bgi_ref[0]                                                   # (1, 3H) f32 (bih + bhh[r,z])
    bhn = bhn_ref[0]                                                   # (1, H)  f32

    # input-gate matmul hoisted out of the recurrence: whole sequence at once
    gi_ref[...] = (jnp.dot(xin_ref[...].astype(bf16), wih,
                           preferred_element_type=f32) + bgi)          # (TB, 3H)

    lens = len_ref[...]                                                # (Bp, 1) int32
    h = jnp.zeros((Bp, H), f32)
    h_last = jnp.zeros((Bp, H), f32)

    # TODO(synk): whh could be held in MXU weight regs across the 8 steps via
    # pltpu.matmul_push_rhs / matmul_acc_lhs / matmul_pop; kept jnp.dot for
    # portability across v5e/v6e/v7x.
    for t in range(T):                                                 # static -> fully unrolled
        gi = gi_ref[t * Bp:(t + 1) * Bp, :]                            # (Bp, 3H)
        gh = jnp.dot(h.astype(bf16), whh, preferred_element_type=f32)  # (Bp, 3H)
        r = jax.nn.sigmoid(gi[:, 0:H] + gh[:, 0:H])
        z = jax.nn.sigmoid(gi[:, H:2 * H] + gh[:, H:2 * H])
        n = jnp.tanh(gi[:, 2 * H:3 * H] + r * (gh[:, 2 * H:3 * H] + bhn))
        h = (1.0 - z) * n + z * h
        # select output at t == length-1 (padded rows have length 0 -> stay 0)
        h_last = jnp.where(lens == (t + 1), h, h_last)
        # next layer's input: residual with the ORIGINAL batch embedding
        # (wasted at the last layer, but it is a tiny scratch store)
        xin_ref[t * Bp:(t + 1) * Bp, :] = (
            emb_ref[t * Bp:(t + 1) * Bp, :] + jnp.maximum(h, 0.0))

    # ---- final hash layer: full dense (Bp, H) tile store, last layer only ----
    @pl.when(l == L - 1)
    def _():
        out_ref[...] = jnp.tanh(h_last)


# ----------------------------------------------------------------------------
# wrapper: host-side folds (G, G[data], biases), bf16 casts, one pallas_call
# ----------------------------------------------------------------------------
def hhltraj_forward(params, fps):
    hbat, dv2, invde, data, data_length = fps
    f32, bf16 = jnp.float32, jnp.bfloat16
    hbat = hbat.astype(f32)
    dv2 = dv2.astype(f32)
    invde = invde.astype(f32)

    E, N = hbat.shape
    H = params["poi"].shape[1]
    B, T = data.shape
    L = params["wih_t"].shape[0]
    Bp = max(8, -(-B // 8) * 8)                 # pad batch to a multiple of 8

    # host fold: G = diag(DV2) Hbat^T diag(invDE) Hbat diag(DV2)   (N x N, tiny)
    p = hbat * dv2[None, :]                                   # (E, N)
    q = dv2[:, None] * hbat.T * invde[None, :]                # (N, E)
    g = q @ p                                                 # (N, N)

    # host-side embedding gather: rows of G, time-major (row index = t*Bp + b)
    data_p = jnp.zeros((Bp, T), jnp.int32).at[:B, :].set(data.astype(jnp.int32))
    g_gath = g[data_p.T.reshape(T * Bp)]                      # (T*Bp, N)
    lens_col = (jnp.zeros((Bp,), jnp.int32)
                .at[:B].set(data_length.astype(jnp.int32)).reshape(Bp, 1))

    # fold r/z halves of the hidden bias into the once-per-layer input bias
    bih = params["bih"].reshape(L, 1, 3 * H).astype(f32)
    bhh = params["bhh"].reshape(L, 1, 3 * H).astype(f32)
    bgi = bih.at[:, :, :2 * H].add(bhh[:, :, :2 * H])
    bhn = bhh[:, :, 2 * H:]

    ins = (
        g.astype(bf16), g_gath.astype(bf16),
        params["poi"].astype(bf16),
        params["w1"].astype(bf16), params["b1"].reshape(1, H).astype(f32),
        params["w2"].astype(bf16), params["b2"].reshape(1, H).astype(f32),
        lens_col,
        params["wih_t"].astype(bf16), params["whh_t"].astype(bf16),
        bgi, bhn,
    )

    def rep_spec(shape):                         # constant block across the layer axis
        nd = len(shape)
        return pl.BlockSpec(shape, lambda l, _nd=nd: (0,) * _nd)

    def layer_spec(shape):                       # (L, ...) arrays: one layer per step
        nd = len(shape)
        return pl.BlockSpec((1,) + tuple(shape[1:]),
                            lambda l, _nd=nd: (l,) + (0,) * (_nd - 1))

    in_specs = ([rep_spec(a.shape) for a in ins[:8]]
                + [layer_spec(a.shape) for a in ins[8:]])

    TB = T * Bp
    mm_flops = 2 * (2 * N * H * H + N * N * H + TB * N * H
                    + L * 2 * TB * H * 3 * H)
    cost = pl.CostEstimate(
        flops=int(mm_flops),
        transcendentals=int(L * TB * 3 * H + Bp * H),
        bytes_accessed=int(sum(int(a.size) * a.dtype.itemsize for a in ins)
                           + Bp * H * 4),
    )

    grid_spec = pltpu.PrefetchScalarGridSpec(
        num_scalar_prefetch=0,
        grid=(L,),                               # layer axis: overlaps layer l+1 weight DMA
        in_specs=in_specs,
        out_specs=pl.BlockSpec((Bp, H), lambda l: (0, 0)),
        scratch_shapes=[pltpu.VMEM((TB, H), f32),        # batch embedding (residual source)
                        pltpu.VMEM((TB, H), f32),        # next-layer GRU input
                        pltpu.VMEM((TB, 3 * H), f32)],   # hoisted input gates
    )
    # NOTE: single TensorCore by design — at Bp=8 a dual-TC split of the GRU
    # would only add cross-core sync to a latency-bound microkernel.
    out = pl.pallas_call(
        fused_hhltraj_kernel,
        out_shape=jax.ShapeDtypeStruct((Bp, H), f32),
        grid_spec=grid_spec,
        compiler_params=pltpu.CompilerParams(dimension_semantics=("arbitrary",)),
        cost_estimate=cost,
    )(*ins)
    return out[:B]


# ----------------------------------------------------------------------------
# parameters
# ----------------------------------------------------------------------------
def init_params(key, nodes, latent, layers):
    ks = jax.random.split(key, 9)
    s = 0.1
    return {
        "poi": jax.random.normal(ks[0], (nodes, latent), jnp.float32),
        "w1": s * jax.random.normal(ks[1], (latent, latent), jnp.float32),
        "b1": s * jax.random.normal(ks[2], (latent,), jnp.float32),
        "w2": s * jax.random.normal(ks[3], (latent, latent), jnp.float32),
        "b2": s * jax.random.normal(ks[4], (latent,), jnp.float32),
        # GRU weights pre-transposed to (H, 3H); gate order r, z, n (PyTorch)
        "wih_t": s * jax.random.normal(ks[5], (layers, latent, 3 * latent), jnp.float32),
        "whh_t": s * jax.random.normal(ks[6], (layers, latent, 3 * latent), jnp.float32),
        "bih": s * jax.random.normal(ks[7], (layers, 3 * latent), jnp.float32),
        "bhh": s * jax.random.normal(ks[8], (layers, 3 * latent), jnp.float32),
    }


if __name__ == "__main__":
    NODES, EDGES, LATENT, B, T, LAYERS = 32, 16, 128, 4, 8, 2
    key = jax.random.PRNGKey(0)
    k0, k1, k2, k3, k4 = jax.random.split(key, 5)

    # synthetic hypergraph incidence (E, N) and degree vectors
    hbat = (jax.random.uniform(k0, (EDGES, NODES)) < 0.3).astype(jnp.float32)
    dv2 = jax.random.uniform(k1, (NODES,), minval=0.1, maxval=1.0)
    invde = jax.random.uniform(k2, (EDGES,), minval=0.1, maxval=1.0)

    # trajectories: node indices + (descending, pack_padded-compatible) lengths
    data = jax.random.randint(k3, (B, T), 0, NODES, dtype=jnp.int32)
    data_length = jnp.array([8, 7, 5, 3], dtype=jnp.int32)

    params = init_params(k4, NODES, LATENT, LAYERS)

    out = hhltraj_forward(params, (hbat, dv2, invde, data, data_length))
    out = jax.block_until_ready(out)

    assert out.shape == (B, LATENT)
    assert bool(jnp.all(jnp.isfinite(out)))
    assert bool(jnp.all(jnp.abs(out) <= 1.0))   # tanh range
    print("KERNEL_OK")
</pallas_src>

<mosaic_0001>
module attributes {stable_mosaic.version = 11 : i64} {
  func.func @fused_hhltraj_kernel(%arg0: i32, %arg1: memref<32x32xbf16, #tpu.memory_space<vmem>>, %arg2: memref<64x32xbf16, #tpu.memory_space<vmem>>, %arg3: memref<32x128xbf16, #tpu.memory_space<vmem>>, %arg4: memref<128x128xbf16, #tpu.memory_space<vmem>>, %arg5: memref<1x128xf32, #tpu.memory_space<vmem>>, %arg6: memref<128x128xbf16, #tpu.memory_space<vmem>>, %arg7: memref<1x128xf32, #tpu.memory_space<vmem>>, %arg8: memref<8x1xi32, #tpu.memory_space<vmem>>, %arg9: memref<1x128x384xbf16, #tpu.memory_space<vmem>>, %arg10: memref<1x128x384xbf16, #tpu.memory_space<vmem>>, %arg11: memref<1x1x384xf32, #tpu.memory_space<vmem>>, %arg12: memref<1x1x128xf32, #tpu.memory_space<vmem>>, %arg13: memref<8x128xf32, #tpu.memory_space<vmem>>, %arg14: memref<64x128xf32, #tpu.memory_space<vmem>>, %arg15: memref<64x128xf32, #tpu.memory_space<vmem>>, %arg16: memref<64x384xf32, #tpu.memory_space<vmem>>) attributes {dimension_semantics = [#tpu.dimension_semantics<arbitrary>], iteration_bounds = array<i64: 2>, scalar_prefetch = 0 : i64, scratch_operands = 3 : i64, tpu.core_type = #tpu.core_type<tc>, window_params = [{pipeline_mode = #tpu.pipeline_mode<synchronous>, transform_indices = @transform_0, window_bounds = array<i64: 32, 32>}, {pipeline_mode = #tpu.pipeline_mode<synchronous>, transform_indices = @transform_1, window_bounds = array<i64: 64, 32>}, {pipeline_mode = #tpu.pipeline_mode<synchronous>, transform_indices = @transform_2, window_bounds = array<i64: 32, 128>}, {pipeline_mode = #tpu.pipeline_mode<synchronous>, transform_indices = @transform_3, window_bounds = array<i64: 128, 128>}, {pipeline_mode = #tpu.pipeline_mode<synchronous>, transform_indices = @transform_4, window_bounds = array<i64: 1, 128>}, {pipeline_mode = #tpu.pipeline_mode<synchronous>, transform_indices = @transform_5, window_bounds = array<i64: 128, 128>}, {pipeline_mode = #tpu.pipeline_mode<synchronous>, transform_indices = @transform_6, window_bounds = array<i64: 1, 128>}, {pipeline_mode = #tpu.pipeline_mode<synchronous>, transform_indices = @transform_7, window_bounds = array<i64: 8, 1>}, {transform_indices = @transform_8, window_bounds = array<i64: 1, 128, 384>}, {transform_indices = @transform_9, window_bounds = array<i64: 1, 128, 384>}, {transform_indices = @transform_10, window_bounds = array<i64: 1, 1, 384>}, {transform_indices = @transform_11, window_bounds = array<i64: 1, 1, 128>}, {pipeline_mode = #tpu.pipeline_mode<synchronous>, transform_indices = @transform_12, window_bounds = array<i64: 8, 128>}]} {
    %c0_i32 = arith.constant 0 : i32
    %0 = arith.cmpi eq, %arg0, %c0_i32 : i32
    %1 = arith.extui %0 : i1 to i32
    %c0_i32_0 = arith.constant 0 : i32
    %2 = arith.cmpi ne, %1, %c0_i32_0 : i32
    scf.if %2 {
      %c0_103 = arith.constant 0 : index
      %c0_104 = arith.constant 0 : index
      %351 = vector.load %arg3[%c0_103, %c0_104] : memref<32x128xbf16, #tpu.memory_space<vmem>>, vector<32x128xbf16>
      %c0_105 = arith.constant 0 : index
      %c0_106 = arith.constant 0 : index
      %352 = vector.load %arg4[%c0_105, %c0_106] : memref<128x128xbf16, #tpu.memory_space<vmem>>, vector<128x128xbf16>
      %cst_107 = arith.constant dense<0.000000e+00> : vector<32x128xf32>
      %353 = tpu.matmul %351, %352, %cst_107 {dimension_numbers = #tpu.dot_dimension_numbers<[1], [0], [0], [1], [0, 0, 1, 1], [], []>} : vector<32x128xbf16>, vector<128x128xbf16>, vector<32x128xf32> -> vector<32x128xf32>
      %c0_108 = arith.constant 0 : index
      %c0_109 = arith.constant 0 : index
      %354 = vector.load %arg5[%c0_108, %c0_109] : memref<1x128xf32, #tpu.memory_space<vmem>>, vector<1x128xf32>
      %355 = vector.broadcast %354 : vector<1x128xf32> to vector<32x128xf32>
      %356 = arith.addf %353, %355 : vector<32x128xf32>
      %c0_110 = arith.constant 0 : index
      %c0_111 = arith.constant 0 : index
      %357 = vector.load %arg1[%c0_110, %c0_111] : memref<32x32xbf16, #tpu.memory_space<vmem>>, vector<32x32xbf16>
      %358 = arith.truncf %356 : vector<32x128xf32> to vector<32x128xbf16>
      %cst_112 = arith.constant dense<0.000000e+00> : vector<32x128xf32>
      %359 = tpu.matmul %357, %358, %cst_112 {dimension_numbers = #tpu.dot_dimension_numbers<[1], [0], [0], [1], [0, 0, 1, 1], [], []>} : vector<32x32xbf16>, vector<32x128xbf16>, vector<32x128xf32> -> vector<32x128xf32>
      %cst_113 = arith.constant 0.000000e+00 : f32
      %360 = vector.broadcast %cst_113 : f32 to vector<32x128xf32>
      %361 = arith.maximumf %359, %360 : vector<32x128xf32>
      %362 = arith.extf %351 : vector<32x128xbf16> to vector<32x128xf32>
      %363 = arith.addf %361, %362 : vector<32x128xf32>
      %364 = arith.truncf %363 : vector<32x128xf32> to vector<32x128xbf16>
      %c0_114 = arith.constant 0 : index
      %c0_115 = arith.constant 0 : index
      %365 = vector.load %arg6[%c0_114, %c0_115] : memref<128x128xbf16, #tpu.memory_space<vmem>>, vector<128x128xbf16>
      %cst_116 = arith.constant dense<0.000000e+00> : vector<32x128xf32>
      %366 = tpu.matmul %364, %365, %cst_116 {dimension_numbers = #tpu.dot_dimension_numbers<[1], [0], [0], [1], [0, 0, 1, 1], [], []>} : vector<32x128xbf16>, vector<128x128xbf16>, vector<32x128xf32> -> vector<32x128xf32>
      %c0_117 = arith.constant 0 : index
      %c0_118 = arith.constant 0 : index
      %367 = vector.load %arg7[%c0_117, %c0_118] : memref<1x128xf32, #tpu.memory_space<vmem>>, vector<1x128xf32>
      %368 = vector.broadcast %367 : vector<1x128xf32> to vector<32x128xf32>
      %369 = arith.addf %366, %368 : vector<32x128xf32>
      %c0_119 = arith.constant 0 : index
      %c0_120 = arith.constant 0 : index
      %370 = vector.load %arg2[%c0_119, %c0_120] : memref<64x32xbf16, #tpu.memory_space<vmem>>, vector<64x32xbf16>
      %371 = arith.truncf %369 : vector<32x128xf32> to vector<32x128xbf16>
      %cst_121 = arith.constant dense<0.000000e+00> : vector<64x128xf32>
      %372 = tpu.matmul %370, %371, %cst_121 {dimension_numbers = #tpu.dot_dimension_numbers<[1], [0], [0], [1], [0, 0, 1, 1], [], []>} : vector<64x32xbf16>, vector<32x128xbf16>, vector<64x128xf32> -> vector<64x128xf32>
      %c0_122 = arith.constant 0 : index
      %c0_123 = arith.constant 0 : index
      %373 = vector.load %arg14[%c0_122, %c0_123] : memref<64x128xf32, #tpu.memory_space<vmem>>, vector<64x128xf32>
      tpu.vector_store %arg14[%c0_122, %c0_123], %372 {strides = array<i32>} : memref<64x128xf32, #tpu.memory_space<vmem>>, vector<64x128xf32>,
      %c0_124 = arith.constant 0 : index
      %c0_125 = arith.constant 0 : index
      %374 = vector.load %arg15[%c0_124, %c0_125] : memref<64x128xf32, #tpu.memory_space<vmem>>, vector<64x128xf32>
      tpu.vector_store %arg15[%c0_124, %c0_125], %372 {strides = array<i32>} : memref<64x128xf32, #tpu.memory_space<vmem>>, vector<64x128xf32>,
    } else {
    }
    %c0 = arith.constant 0 : index
    %c0_1 = arith.constant 0 : index
    %c0_2 = arith.constant 0 : index
    %3 = vector.load %arg9[%c0, %c0_1, %c0_2] : memref<1x128x384xbf16, #tpu.memory_space<vmem>>, vector<1x128x384xbf16>
    %4 = vector.shape_cast %3 : vector<1x128x384xbf16> to vector<128x384xbf16>
    %c0_3 = arith.constant 0 : index
    %c0_4 = arith.constant 0 : index
    %c0_5 = arith.constant 0 : index
    %5 = vector.load %arg10[%c0_3, %c0_4, %c0_5] : memref<1x128x384xbf16, #tpu.memory_space<vmem>>, vector<1x128x384xbf16>
    %6 = vector.shape_cast %5 : vector<1x128x384xbf16> to vector<128x384xbf16>
    %c0_6 = arith.constant 0 : index
    %c0_7 = arith.constant 0 : index
    %c0_8 = arith.constant 0 : index
    %7 = vector.load %arg11[%c0_6, %c0_7, %c0_8] : memref<1x1x384xf32, #tpu.memory_space<vmem>>, vector<1x1x384xf32>
    %8 = vector.shape_cast %7 : vector<1x1x384xf32> to vector<1x384xf32>
    %c0_9 = arith.constant 0 : index
    %c0_10 = arith.constant 0 : index
    %c0_11 = arith.constant 0 : index
    %9 = vector.load %arg12[%c0_9, %c0_10, %c0_11] : memref<1x1x128xf32, #tpu.memory_space<vmem>>, vector<1x1x128xf32>
    %10 = vector.shape_cast %9 : vector<1x1x128xf32> to vector<1x128xf32>
    %c0_12 = arith.constant 0 : index
    %c0_13 = arith.constant 0 : index
    %11 = vector.load %arg15[%c0_12, %c0_13] : memref<64x128xf32, #tpu.memory_space<vmem>>, vector<64x128xf32>
    %12 = arith.truncf %11 : vector<64x128xf32> to vector<64x128xbf16>
    %cst = arith.constant dense<0.000000e+00> : vector<64x384xf32>
    %13 = tpu.matmul %12, %4, %cst {dimension_numbers = #tpu.dot_dimension_numbers<[1], [0], [0], [1], [0, 0, 1, 1], [], []>} : vector<64x128xbf16>, vector<128x384xbf16>, vector<64x384xf32> -> vector<64x384xf32>
    %14 = vector.broadcast %8 : vector<1x384xf32> to vector<64x384xf32>
    %15 = arith.addf %13, %14 : vector<64x384xf32>
    %c0_14 = arith.constant 0 : index
    %c0_15 = arith.constant 0 : index
    %16 = vector.load %arg16[%c0_14, %c0_15] : memref<64x384xf32, #tpu.memory_space<vmem>>, vector<64x384xf32>
    tpu.vector_store %arg16[%c0_14, %c0_15], %15 {strides = array<i32>} : memref<64x384xf32, #tpu.memory_space<vmem>>, vector<64x384xf32>,
    %c0_16 = arith.constant 0 : index
    %c0_17 = arith.constant 0 : index
    %17 = vector.load %arg8[%c0_16, %c0_17] : memref<8x1xi32, #tpu.memory_space<vmem>>, vector<8x1xi32>
    %cst_18 = arith.constant 0.000000e+00 : f32
    %18 = vector.broadcast %cst_18 : f32 to vector<8x128xf32>
    %cst_19 = arith.constant 0.000000e+00 : f32
    %19 = vector.broadcast %cst_19 : f32 to vector<8x128xf32>
    %c0_20 = arith.constant 0 : index
    %c0_21 = arith.constant 0 : index
    %20 = vector.load %arg16[%c0_20, %c0_21] : memref<64x384xf32, #tpu.memory_space<vmem>>, vector<8x384xf32>
    %21 = arith.truncf %18 : vector<8x128xf32> to vector<8x128xbf16>
    %cst_22 = arith.constant dense<0.000000e+00> : vector<8x384xf32>
    %22 = tpu.matmul %21, %6, %cst_22 {dimension_numbers = #tpu.dot_dimension_numbers<[1], [0], [0], [1], [0, 0, 1, 1], [], []>} : vector<8x128xbf16>, vector<128x384xbf16>, vector<8x384xf32> -> vector<8x384xf32>
    %23 = vector.extract_strided_slice %20 {offsets = [0, 0], sizes = [8, 128], strides = [1, 1]} : vector<8x384xf32> to vector<8x128xf32>
    %24 = vector.extract_strided_slice %22 {offsets = [0, 0], sizes = [8, 128], strides = [1, 1]} : vector<8x384xf32> to vector<8x128xf32>
    %25 = arith.addf %23, %24 : vector<8x128xf32>
    %26 = arith.negf %25 : vector<8x128xf32>
    %27 = math.exp %26 : vector<8x128xf32>
    %cst_23 = arith.constant 1.000000e+00 : f32
    %28 = vector.broadcast %cst_23 : f32 to vector<8x128xf32>
    %29 = arith.addf %28, %27 : vector<8x128xf32>
    %30 = arith.divf %28, %29 : vector<8x128xf32>
    %31 = vector.extract_strided_slice %20 {offsets = [0, 128], sizes = [8, 128], strides = [1, 1]} : vector<8x384xf32> to vector<8x128xf32>
    %32 = vector.extract_strided_slice %22 {offsets = [0, 128], sizes = [8, 128], strides = [1, 1]} : vector<8x384xf32> to vector<8x128xf32>
    %33 = arith.addf %31, %32 : vector<8x128xf32>
    %34 = arith.negf %33 : vector<8x128xf32>
    %35 = math.exp %34 : vector<8x128xf32>
    %cst_24 = arith.constant 1.000000e+00 : f32
    %36 = vector.broadcast %cst_24 : f32 to vector<8x128xf32>
    %37 = arith.addf %36, %35 : vector<8x128xf32>
    %38 = arith.divf %36, %37 : vector<8x128xf32>
    %39 = vector.extract_strided_slice %20 {offsets = [0, 256], sizes = [8, 128], strides = [1, 1]} : vector<8x384xf32> to vector<8x128xf32>
    %40 = vector.extract_strided_slice %22 {offsets = [0, 256], sizes = [8, 128], strides = [1, 1]} : vector<8x384xf32> to vector<8x128xf32>
    %41 = vector.broadcast %10 : vector<1x128xf32> to vector<8x128xf32>
    %42 = arith.addf %40, %41 : vector<8x128xf32>
    %43 = arith.mulf %30, %42 : vector<8x128xf32>
    %44 = arith.addf %39, %43 : vector<8x128xf32>
    %45 = math.tanh %44 : vector<8x128xf32>
    %cst_25 = arith.constant 1.000000e+00 : f32
    %46 = vector.broadcast %cst_25 : f32 to vector<8x128xf32>
    %47 = arith.subf %46, %38 : vector<8x128xf32>
    %48 = arith.mulf %47, %45 : vector<8x128xf32>
    %49 = arith.mulf %38, %18 : vector<8x128xf32>
    %50 = arith.addf %48, %49 : vector<8x128xf32>
    %c1_i32 = arith.constant 1 : i32
    %51 = vector.broadcast %c1_i32 : i32 to vector<8x1xi32>
    %52 = arith.cmpi eq, %17, %51 : vector<8x1xi32>
    %53 = vector.shape_cast %52 : vector<8x1xi1> to vector<8x1xi1>
    %54 = vector.broadcast %53 : vector<8x1xi1> to vector<8x128xi1>
    %55 = arith.select %54, %50, %19 : vector<8x128xi1>, vector<8x128xf32>
    %c0_26 = arith.constant 0 : index
    %c0_27 = arith.constant 0 : index
    %56 = vector.load %arg14[%c0_26, %c0_27] : memref<64x128xf32, #tpu.memory_space<vmem>>, vector<8x128xf32>
    %cst_28 = arith.constant 0.000000e+00 : f32
    %57 = vector.broadcast %cst_28 : f32 to vector<8x128xf32>
    %58 = arith.maximumf %50, %57 : vector<8x128xf32>
    %59 = arith.addf %56, %58 : vector<8x128xf32>
    %c0_29 = arith.constant 0 : index
    %c0_30 = arith.constant 0 : index
    %60 = vector.load %arg15[%c0_29, %c0_30] : memref<64x128xf32, #tpu.memory_space<vmem>>, vector<8x128xf32>
    tpu.vector_store %arg15[%c0_29, %c0_30], %59 {strides = array<i32>} : memref<64x128xf32, #tpu.memory_space<vmem>>, vector<8x128xf32>,
    %c8 = arith.constant 8 : index
    %c0_31 = arith.constant 0 : index
    %61 = vector.load %arg16[%c8, %c0_31] : memref<64x384xf32, #tpu.memory_space<vmem>>, vector<8x384xf32>
    %62 = arith.truncf %50 : vector<8x128xf32> to vector<8x128xbf16>
    %cst_32 = arith.constant dense<0.000000e+00> : vector<8x384xf32>
    %63 = tpu.matmul %62, %6, %cst_32 {dimension_numbers = #tpu.dot_dimension_numbers<[1], [0], [0], [1], [0, 0, 1, 1], [], []>} : vector<8x128xbf16>, vector<128x384xbf16>, vector<8x384xf32> -> vector<8x384xf32>
    %64 = vector.extract_strided_slice %61 {offsets = [0, 0], sizes = [8, 128], strides = [1, 1]} : vector<8x384xf32> to vector<8x128xf32>
    %65 = vector.extract_strided_slice %63 {offsets = [0, 0], sizes = [8, 128], strides = [1, 1]} : vector<8x384xf32> to vector<8x128xf32>
    %66 = arith.addf %64, %65 : vector<8x128xf32>
    %67 = arith.negf %66 : vector<8x128xf32>
    %68 = math.exp %67 : vector<8x128xf32>
    %cst_33 = arith.constant 1.000000e+00 : f32
    %69 = vector.broadcast %cst_33 : f32 to vector<8x128xf32>
    %70 = arith.addf %69, %68 : vector<8x128xf32>
    %71 = arith.divf %69, %70 : vector<8x128xf32>
    %72 = vector.extract_strided_slice %61 {offsets = [0, 128], sizes = [8, 128], strides = [1, 1]} : vector<8x384xf32> to vector<8x128xf32>
    %73 = vector.extract_strided_slice %63 {offsets = [0, 128], sizes = [8, 128], strides = [1, 1]} : vector<8x384xf32> to vector<8x128xf32>
    %74 = arith.addf %72, %73 : vector<8x128xf32>
    %75 = arith.negf %74 : vector<8x128xf32>
    %76 = math.exp %75 : vector<8x128xf32>
    %cst_34 = arith.constant 1.000000e+00 : f32
    %77 = vector.broadcast %cst_34 : f32 to vector<8x128xf32>
    %78 = arith.addf %77, %76 : vector<8x128xf32>
    %79 = arith.divf %77, %78 : vector<8x128xf32>
    %80 = vector.extract_strided_slice %61 {offsets = [0, 256], sizes = [8, 128], strides = [1, 1]} : vector<8x384xf32> to vector<8x128xf32>
    %81 = vector.extract_strided_slice %63 {offsets = [0, 256], sizes = [8, 128], strides = [1, 1]} : vector<8x384xf32> to vector<8x128xf32>
    %82 = vector.broadcast %10 : vector<1x128xf32> to vector<8x128xf32>
    %83 = arith.addf %81, %82 : vector<8x128xf32>
    %84 = arith.mulf %71, %83 : vector<8x128xf32>
    %85 = arith.addf %80, %84 : vector<8x128xf32>
    %86 = math.tanh %85 : vector<8x128xf32>
    %cst_35 = arith.constant 1.000000e+00 : f32
    %87 = vector.broadcast %cst_35 : f32 to vector<8x128xf32>
    %88 = arith.subf %87, %79 : vector<8x128xf32>
    %89 = arith.mulf %88, %86 : vector<8x128xf32>
    %90 = arith.mulf %79, %50 : vector<8x128xf32>
    %91 = arith.addf %89, %90 : vector<8x128xf32>
    %c2_i32 = arith.constant 2 : i32
    %92 = vector.broadcast %c2_i32 : i32 to vector<8x1xi32>
    %93 = arith.cmpi eq, %17, %92 : vector<8x1xi32>
    %94 = vector.shape_cast %93 : vector<8x1xi1> to vector<8x1xi1>
    %95 = vector.broadcast %94 : vector<8x1xi1> to vector<8x128xi1>
    %96 = arith.select %95, %91, %55 : vector<8x128xi1>, vector<8x128xf32>
    %c8_36 = arith.constant 8 : index
    %c0_37 = arith.constant 0 : index
    %97 = vector.load %arg14[%c8_36, %c0_37] : memref<64x128xf32, #tpu.memory_space<vmem>>, vector<8x128xf32>
    %cst_38 = arith.constant 0.000000e+00 : f32
    %98 = vector.broadcast %cst_38 : f32 to vector<8x128xf32>
    %99 = arith.maximumf %91, %98 : vector<8x128xf32>
    %100 = arith.addf %97, %99 : vector<8x128xf32>
    %c8_39 = arith.constant 8 : index
    %c0_40 = arith.constant 0 : index
    %101 = vector.load %arg15[%c8_39, %c0_40] : memref<64x128xf32, #tpu.memory_space<vmem>>, vector<8x128xf32>
    tpu.vector_store %arg15[%c8_39, %c0_40], %100 {strides = array<i32>} : memref<64x128xf32, #tpu.memory_space<vmem>>, vector<8x128xf32>,
    %c16 = arith.constant 16 : index
    %c0_41 = arith.constant 0 : index
    %102 = vector.load %arg16[%c16, %c0_41] : memref<64x384xf32, #tpu.memory_space<vmem>>, vector<8x384xf32>
    %103 = arith.truncf %91 : vector<8x128xf32> to vector<8x128xbf16>
    %cst_42 = arith.constant dense<0.000000e+00> : vector<8x384xf32>
    %104 = tpu.matmul %103, %6, %cst_42 {dimension_numbers = #tpu.dot_dimension_numbers<[1], [0], [0], [1], [0, 0, 1, 1], [], []>} : vector<8x128xbf16>, vector<128x384xbf16>, vector<8x384xf32> -> vector<8x384xf32>
    %105 = vector.extract_strided_slice %102 {offsets = [0, 0], sizes = [8, 128], strides = [1, 1]} : vector<8x384xf32> to vector<8x128xf32>
    %106 = vector.extract_strided_slice %104 {offsets = [0, 0], sizes = [8, 128], strides = [1, 1]} : vector<8x384xf32> to vector<8x128xf32>
    %107 = arith.addf %105, %106 : vector<8x128xf32>
    %108 = arith.negf %107 : vector<8x128xf32>
    %109 = math.exp %108 : vector<8x128xf32>
    %cst_43 = arith.constant 1.000000e+00 : f32
    %110 = vector.broadcast %cst_43 : f32 to vector<8x128xf32>
    %111 = arith.addf %110, %109 : vector<8x128xf32>
    %112 = arith.divf %110, %111 : vector<8x128xf32>
    %113 = vector.extract_strided_slice %102 {offsets = [0, 128], sizes = [8, 128], strides = [1, 1]} : vector<8x384xf32> to vector<8x128xf32>
    %114 = vector.extract_strided_slice %104 {offsets = [0, 128], sizes = [8, 128], strides = [1, 1]} : vector<8x384xf32> to vector<8x128xf32>
    %115 = arith.addf %113, %114 : vector<8x128xf32>
    %116 = arith.negf %115 : vector<8x128xf32>
    %117 = math.exp %116 : vector<8x128xf32>
    %cst_44 = arith.constant 1.000000e+00 : f32
    %118 = vector.broadcast %cst_44 : f32 to vector<8x128xf32>
    %119 = arith.addf %118, %117 : vector<8x128xf32>
    %120 = arith.divf %118, %119 : vector<8x128xf32>
    %121 = vector.extract_strided_slice %102 {offsets = [0, 256], sizes = [8, 128], strides = [1, 1]} : vector<8x384xf32> to vector<8x128xf32>
    %122 = vector.extract_strided_slice %104 {offsets = [0, 256], sizes = [8, 128], strides = [1, 1]} : vector<8x384xf32> to vector<8x128xf32>
    %123 = vector.broadcast %10 : vector<1x128xf32> to vector<8x128xf32>
    %124 = arith.addf %122, %123 : vector<8x128xf32>
    %125 = arith.mulf %112, %124 : vector<8x128xf32>
    %126 = arith.addf %121, %125 : vector<8x128xf32>
    %127 = math.tanh %126 : vector<8x128xf32>
    %cst_45 = arith.constant 1.000000e+00 : f32
    %128 = vector.broadcast %cst_45 : f32 to vector<8x128xf32>
    %129 = arith.subf %128, %120 : vector<8x128xf32>
    %130 = arith.mulf %129, %127 : vector<8x128xf32>
    %131 = arith.mulf %120, %91 : vector<8x128xf32>
    %132 = arith.addf %130, %131 : vector<8x128xf32>
    %c3_i32 = arith.constant 3 : i32
    %133 = vector.broadcast %c3_i32 : i32 to vector<8x1xi32>
    %134 = arith.cmpi eq, %17, %133 : vector<8x1xi32>
    %135 = vector.shape_cast %134 : vector<8x1xi1> to vector<8x1xi1>
    %136 = vector.broadcast %135 : vector<8x1xi1> to vector<8x128xi1>
    %137 = arith.select %136, %132, %96 : vector<8x128xi1>, vector<8x128xf32>
    %c16_46 = arith.constant 16 : index
    %c0_47 = arith.constant 0 : index
    %138 = vector.load %arg14[%c16_46, %c0_47] : memref<64x128xf32, #tpu.memory_space<vmem>>, vector<8x128xf32>
    %cst_48 = arith.constant 0.000000e+00 : f32
    %139 = vector.broadcast %cst_48 : f32 to vector<8x128xf32>
    %140 = arith.maximumf %132, %139 : vector<8x128xf32>
    %141 = arith.addf %138, %140 : vector<8x128xf32>
    %c16_49 = arith.constant 16 : index
    %c0_50 = arith.constant 0 : index
    %142 = vector.load %arg15[%c16_49, %c0_50] : memref<64x128xf32, #tpu.memory_space<vmem>>, vector<8x128xf32>
    tpu.vector_store %arg15[%c16_49, %c0_50], %141 {strides = array<i32>} : memref<64x128xf32, #tpu.memory_space<vmem>>, vector<8x128xf32>,
    %c24 = arith.constant 24 : index
    %c0_51 = arith.constant 0 : index
    %143 = vector.load %arg16[%c24, %c0_51] : memref<64x384xf32, #tpu.memory_space<vmem>>, vector<8x384xf32>
    %144 = arith.truncf %132 : vector<8x128xf32> to vector<8x128xbf16>
    %cst_52 = arith.constant dense<0.000000e+00> : vector<8x384xf32>
    %145 = tpu.matmul %144, %6, %cst_52 {dimension_numbers = #tpu.dot_dimension_numbers<[1], [0], [0], [1], [0, 0, 1, 1], [], []>} : vector<8x128xbf16>, vector<128x384xbf16>, vector<8x384xf32> -> vector<8x384xf32>
    %146 = vector.extract_strided_slice %143 {offsets = [0, 0], sizes = [8, 128], strides = [1, 1]} : vector<8x384xf32> to vector<8x128xf32>
    %147 = vector.extract_strided_slice %145 {offsets = [0, 0], sizes = [8, 128], strides = [1, 1]} : vector<8x384xf32> to vector<8x128xf32>
    %148 = arith.addf %146, %147 : vector<8x128xf32>
    %149 = arith.negf %148 : vector<8x128xf32>
    %150 = math.exp %149 : vector<8x128xf32>
    %cst_53 = arith.constant 1.000000e+00 : f32
    %151 = vector.broadcast %cst_53 : f32 to vector<8x128xf32>
    %152 = arith.addf %151, %150 : vector<8x128xf32>
    %153 = arith.divf %151, %152 : vector<8x128xf32>
    %154 = vector.extract_strided_slice %143 {offsets = [0, 128], sizes = [8, 128], strides = [1, 1]} : vector<8x384xf32> to vector<8x128xf32>
    %155 = vector.extract_strided_slice %145 {offsets = [0, 128], sizes = [8, 128], strides = [1, 1]} : vector<8x384xf32> to vector<8x128xf32>
    %156 = arith.addf %154, %155 : vector<8x128xf32>
    %157 = arith.negf %156 : vector<8x128xf32>
    %158 = math.exp %157 : vector<8x128xf32>
    %cst_54 = arith.constant 1.000000e+00 : f32
    %159 = vector.broadcast %cst_54 : f32 to vector<8x128xf32>
    %160 = arith.addf %159, %158 : vector<8x128xf32>
    %161 = arith.divf %159, %160 : vector<8x128xf32>
    %162 = vector.extract_strided_slice %143 {offsets = [0, 256], sizes = [8, 128], strides = [1, 1]} : vector<8x384xf32> to vector<8x128xf32>
    %163 = vector.extract_strided_slice %145 {offsets = [0, 256], sizes = [8, 128], strides = [1, 1]} : vector<8x384xf32> to vector<8x128xf32>
    %164 = vector.broadcast %10 : vector<1x128xf32> to vector<8x128xf32>
    %165 = arith.addf %163, %164 : vector<8x128xf32>
    %166 = arith.mulf %153, %165 : vector<8x128xf32>
    %167 = arith.addf %162, %166 : vector<8x128xf32>
    %168 = math.tanh %167 : vector<8x128xf32>
    %cst_55 = arith.constant 1.000000e+00 : f32
    %169 = vector.broadcast %cst_55 : f32 to vector<8x128xf32>
    %170 = arith.subf %169, %161 : vector<8x128xf32>
    %171 = arith.mulf %170, %168 : vector<8x128xf32>
    %172 = arith.mulf %161, %132 : vector<8x128xf32>
    %173 = arith.addf %171, %172 : vector<8x128xf32>
    %c4_i32 = arith.constant 4 : i32
    %174 = vector.broadcast %c4_i32 : i32 to vector<8x1xi32>
    %175 = arith.cmpi eq, %17, %174 : vector<8x1xi32>
    %176 = vector.shape_cast %175 : vector<8x1xi1> to vector<8x1xi1>
    %177 = vector.broadcast %176 : vector<8x1xi1> to vector<8x128xi1>
    %178 = arith.select %177, %173, %137 : vector<8x128xi1>, vector<8x128xf32>
    %c24_56 = arith.constant 24 : index
    %c0_57 = arith.constant 0 : index
    %179 = vector.load %arg14[%c24_56, %c0_57] : memref<64x128xf32, #tpu.memory_space<vmem>>, vector<8x128xf32>
    %cst_58 = arith.constant 0.000000e+00 : f32
    %180 = vector.broadcast %cst_58 : f32 to vector<8x128xf32>
    %181 = arith.maximumf %173, %180 : vector<8x128xf32>
    %182 = arith.addf %179, %181 : vector<8x128xf32>
    %c24_59 = arith.constant 24 : index
    %c0_60 = arith.constant 0 : index
    %183 = vector.load %arg15[%c24_59, %c0_60] : memref<64x128xf32, #tpu.memory_space<vmem>>, vector<8x128xf32>
    tpu.vector_store %arg15[%c24_59, %c0_60], %182 {strides = array<i32>} : memref<64x128xf32, #tpu.memory_space<vmem>>, vector<8x128xf32>,
    %c32 = arith.constant 32 : index
    %c0_61 = arith.constant 0 : index
    %184 = vector.load %arg16[%c32, %c0_61] : memref<64x384xf32, #tpu.memory_space<vmem>>, vector<8x384xf32>
    %185 = arith.truncf %173 : vector<8x128xf32> to vector<8x128xbf16>
    %cst_62 = arith.constant dense<0.000000e+00> : vector<8x384xf32>
    %186 = tpu.matmul %185, %6, %cst_62 {dimension_numbers = #tpu.dot_dimension_numbers<[1], [0], [0], [1], [0, 0, 1, 1], [], []>} : vector<8x128xbf16>, vector<128x384xbf16>, vector<8x384xf32> -> vector<8x384xf32>
    %187 = vector.extract_strided_slice %184 {offsets = [0, 0], sizes = [8, 128], strides = [1, 1]} : vector<8x384xf32> to vector<8x128xf32>
    %188 = vector.extract_strided_slice %186 {offsets = [0, 0], sizes = [8, 128], strides = [1, 1]} : vector<8x384xf32> to vector<8x128xf32>
    %189 = arith.addf %187, %188 : vector<8x128xf32>
    %190 = arith.negf %189 : vector<8x128xf32>
    %191 = math.exp %190 : vector<8x128xf32>
    %cst_63 = arith.constant 1.000000e+00 : f32
    %192 = vector.broadcast %cst_63 : f32 to vector<8x128xf32>
    %193 = arith.addf %192, %191 : vector<8x128xf32>
    %194 = arith.divf %192, %193 : vector<8x128xf32>
    %195 = vector.extract_strided_slice %184 {offsets = [0, 128], sizes = [8, 128], strides = [1, 1]} : vector<8x384xf32> to vector<8x128xf32>
    %196 = vector.extract_strided_slice %186 {offsets = [0, 128], sizes = [8, 128], strides = [1, 1]} : vector<8x384xf32> to vector<8x128xf32>
    %197 = arith.addf %195, %196 : vector<8x128xf32>
    %198 = arith.negf %197 : vector<8x128xf32>
    %199 = math.exp %198 : vector<8x128xf32>
    %cst_64 = arith.constant 1.000000e+00 : f32
    %200 = vector.broadcast %cst_64 : f32 to vector<8x128xf32>
    %201 = arith.addf %200, %199 : vector<8x128xf32>
    %202 = arith.divf %200, %201 : vector<8x128xf32>
    %203 = vector.extract_strided_slice %184 {offsets = [0, 256], sizes = [8, 128], strides = [1, 1]} : vector<8x384xf32> to vector<8x128xf32>
    %204 = vector.extract_strided_slice %186 {offsets = [0, 256], sizes = [8, 128], strides = [1, 1]} : vector<8x384xf32> to vector<8x128xf32>
    %205 = vector.broadcast %10 : vector<1x128xf32> to vector<8x128xf32>
    %206 = arith.addf %204, %205 : vector<8x128xf32>
    %207 = arith.mulf %194, %206 : vector<8x128xf32>
    %208 = arith.addf %203, %207 : vector<8x128xf32>
    %209 = math.tanh %208 : vector<8x128xf32>
    %cst_65 = arith.constant 1.000000e+00 : f32
    %210 = vector.broadcast %cst_65 : f32 to vector<8x128xf32>
    %211 = arith.subf %210, %202 : vector<8x128xf32>
    %212 = arith.mulf %211, %209 : vector<8x128xf32>
    %213 = arith.mulf %202, %173 : vector<8x128xf32>
    %214 = arith.addf %212, %213 : vector<8x128xf32>
    %c5_i32 = arith.constant 5 : i32
    %215 = vector.broadcast %c5_i32 : i32 to vector<8x1xi32>
    %216 = arith.cmpi eq, %17, %215 : vector<8x1xi32>
    %217 = vector.shape_cast %216 : vector<8x1xi1> to vector<8x1xi1>
    %218 = vector.broadcast %217 : vector<8x1xi1> to vector<8x128xi1>
    %219 = arith.select %218, %214, %178 : vector<8x128xi1>, vector<8x128xf32>
    %c32_66 = arith.constant 32 : index
    %c0_67 = arith.constant 0 : index
    %220 = vector.load %arg14[%c32_66, %c0_67] : memref<64x128xf32, #tpu.memory_space<vmem>>, vector<8x128xf32>
    %cst_68 = arith.constant 0.000000e+00 : f32
    %221 = vector.broadcast %cst_68 : f32 to vector<8x128xf32>
    %222 = arith.maximumf %214, %221 : vector<8x128xf32>
    %223 = arith.addf %220, %222 : vector<8x128xf32>
    %c32_69 = arith.constant 32 : index
    %c0_70 = arith.constant 0 : index
    %224 = vector.load %arg15[%c32_69, %c0_70] : memref<64x128xf32, #tpu.memory_space<vmem>>, vector<8x128xf32>
    tpu.vector_store %arg15[%c32_69, %c0_70], %223 {strides = array<i32>} : memref<64x128xf32, #tpu.memory_space<vmem>>, vector<8x128xf32>,
    %c40 = arith.constant 40 : index
    %c0_71 = arith.constant 0 : index
    %225 = vector.load %arg16[%c40, %c0_71] : memref<64x384xf32, #tpu.memory_space<vmem>>, vector<8x384xf32>
    %226 = arith.truncf %214 : vector<8x128xf32> to vector<8x128xbf16>
    %cst_72 = arith.constant dense<0.000000e+00> : vector<8x384xf32>
    %227 = tpu.matmul %226, %6, %cst_72 {dimension_numbers = #tpu.dot_dimension_numbers<[1], [0], [0], [1], [0, 0, 1, 1], [], []>} : vector<8x128xbf16>, vector<128x384xbf16>, vector<8x384xf32> -> vector<8x384xf32>
    %228 = vector.extract_strided_slice %225 {offsets = [0, 0], sizes = [8, 128], strides = [1, 1]} : vector<8x384xf32> to vector<8x128xf32>
    %229 = vector.extract_strided_slice %227 {offsets = [0, 0], sizes = [8, 128], strides = [1, 1]} : vector<8x384xf32> to vector<8x128xf32>
    %230 = arith.addf %228, %229 : vector<8x128xf32>
    %231 = arith.negf %230 : vector<8x128xf32>
    %232 = math.exp %231 : vector<8x128xf32>
    %cst_73 = arith.constant 1.000000e+00 : f32
    %233 = vector.broadcast %cst_73 : f32 to vector<8x128xf32>
    %234 = arith.addf %233, %232 : vector<8x128xf32>
    %235 = arith.divf %233, %234 : vector<8x128xf32>
    %236 = vector.extract_strided_slice %225 {offsets = [0, 128], sizes = [8, 128], strides = [1, 1]} : vector<8x384xf32> to vector<8x128xf32>
    %237 = vector.extract_strided_slice %227 {offsets = [0, 128], sizes = [8, 128], strides = [1, 1]} : vector<8x384xf32> to vector<8x128xf32>
    %238 = arith.addf %236, %237 : vector<8x128xf32>
    %239 = arith.negf %238 : vector<8x128xf32>
    %240 = math.exp %239 : vector<8x128xf32>
    %cst_74 = arith.constant 1.000000e+00 : f32
    %241 = vector.broadcast %cst_74 : f32 to vector<8x128xf32>
    %242 = arith.addf %241, %240 : vector<8x128xf32>
    %243 = arith.divf %241, %242 : vector<8x128xf32>
    %244 = vector.extract_strided_slice %225 {offsets = [0, 256], sizes = [8, 128], strides = [1, 1]} : vector<8x384xf32> to vector<8x128xf32>
    %245 = vector.extract_strided_slice %227 {offsets = [0, 256], sizes = [8, 128], strides = [1, 1]} : vector<8x384xf32> to vector<8x128xf32>
    %246 = vector.broadcast %10 : vector<1x128xf32> to vector<8x128xf32>
    %247 = arith.addf %245, %246 : vector<8x128xf32>
    %248 = arith.mulf %235, %247 : vector<8x128xf32>
    %249 = arith.addf %244, %248 : vector<8x128xf32>
    %250 = math.tanh %249 : vector<8x128xf32>
    %cst_75 = arith.constant 1.000000e+00 : f32
    %251 = vector.broadcast %cst_75 : f32 to vector<8x128xf32>
    %252 = arith.subf %251, %243 : vector<8x128xf32>
    %253 = arith.mulf %252, %250 : vector<8x128xf32>
    %254 = arith.mulf %243, %214 : vector<8x128xf32>
    %255 = arith.addf %253, %254 : vector<8x128xf32>
    %c6_i32 = arith.constant 6 : i32
    %256 = vector.broadcast %c6_i32 : i32 to vector<8x1xi32>
    %257 = arith.cmpi eq, %17, %256 : vector<8x1xi32>
    %258 = vector.shape_cast %257 : vector<8x1xi1> to vector<8x1xi1>
    %259 = vector.broadcast %258 : vector<8x1xi1> to vector<8x128xi1>
    %260 = arith.select %259, %255, %219 : vector<8x128xi1>, vector<8x128xf32>
    %c40_76 = arith.constant 40 : index
    %c0_77 = arith.constant 0 : index
    %261 = vector.load %arg14[%c40_76, %c0_77] : memref<64x128xf32, #tpu.memory_space<vmem>>, vector<8x128xf32>
    %cst_78 = arith.constant 0.000000e+00 : f32
    %262 = vector.broadcast %cst_78 : f32 to vector<8x128xf32>
    %263 = arith.maximumf %255, %262 : vector<8x128xf32>
    %264 = arith.addf %261, %263 : vector<8x128xf32>
    %c40_79 = arith.constant 40 : index
    %c0_80 = arith.constant 0 : index
    %265 = vector.load %arg15[%c40_79, %c0_80] : memref<64x128xf32, #tpu.memory_space<vmem>>, vector<8x128xf32>
    tpu.vector_store %arg15[%c40_79, %c0_80], %264 {strides = array<i32>} : memref<64x128xf32, #tpu.memory_space<vmem>>, vector<8x128xf32>,
    %c48 = arith.constant 48 : index
    %c0_81 = arith.constant 0 : index
    %266 = vector.load %arg16[%c48, %c0_81] : memref<64x384xf32, #tpu.memory_space<vmem>>, vector<8x384xf32>
    %267 = arith.truncf %255 : vector<8x128xf32> to vector<8x128xbf16>
    %cst_82 = arith.constant dense<0.000000e+00> : vector<8x384xf32>
    %268 = tpu.matmul %267, %6, %cst_82 {dimension_numbers = #tpu.dot_dimension_numbers<[1], [0], [0], [1], [0, 0, 1, 1], [], []>} : vector<8x128xbf16>, vector<128x384xbf16>, vector<8x384xf32> -> vector<8x384xf32>
    %269 = vector.extract_strided_slice %266 {offsets = [0, 0], sizes = [8, 128], strides = [1, 1]} : vector<8x384xf32> to vector<8x128xf32>
    %270 = vector.extract_strided_slice %268 {offsets = [0, 0], sizes = [8, 128], strides = [1, 1]} : vector<8x384xf32> to vector<8x128xf32>
    %271 = arith.addf %269, %270 : vector<8x128xf32>
    %272 = arith.negf %271 : vector<8x128xf32>
    %273 = math.exp %272 : vector<8x128xf32>
    %cst_83 = arith.constant 1.000000e+00 : f32
    %274 = vector.broadcast %cst_83 : f32 to vector<8x128xf32>
    %275 = arith.addf %274, %273 : vector<8x128xf32>
    %276 = arith.divf %274, %275 : vector<8x128xf32>
    %277 = vector.extract_strided_slice %266 {offsets = [0, 128], sizes = [8, 128], strides = [1, 1]} : vector<8x384xf32> to vector<8x128xf32>
    %278 = vector.extract_strided_slice %268 {offsets = [0, 128], sizes = [8, 128], strides = [1, 1]} : vector<8x384xf32> to vector<8x128xf32>
    %279 = arith.addf %277, %278 : vector<8x128xf32>
    %280 = arith.negf %279 : vector<8x128xf32>
    %281 = math.exp %280 : vector<8x128xf32>
    %cst_84 = arith.constant 1.000000e+00 : f32
    %282 = vector.broadcast %cst_84 : f32 to vector<8x128xf32>
    %283 = arith.addf %282, %281 : vector<8x128xf32>
    %284 = arith.divf %282, %283 : vector<8x128xf32>
    %285 = vector.extract_strided_slice %266 {offsets = [0, 256], sizes = [8, 128], strides = [1, 1]} : vector<8x384xf32> to vector<8x128xf32>
    %286 = vector.extract_strided_slice %268 {offsets = [0, 256], sizes = [8, 128], strides = [1, 1]} : vector<8x384xf32> to vector<8x128xf32>
    %287 = vector.broadcast %10 : vector<1x128xf32> to vector<8x128xf32>
    %288 = arith.addf %286, %287 : vector<8x128xf32>
    %289 = arith.mulf %276, %288 : vector<8x128xf32>
    %290 = arith.addf %285, %289 : vector<8x128xf32>
    %291 = math.tanh %290 : vector<8x128xf32>
    %cst_85 = arith.constant 1.000000e+00 : f32
    %292 = vector.broadcast %cst_85 : f32 to vector<8x128xf32>
    %293 = arith.subf %292, %284 : vector<8x128xf32>
    %294 = arith.mulf %293, %291 : vector<8x128xf32>
    %295 = arith.mulf %284, %255 : vector<8x128xf32>
    %296 = arith.addf %294, %295 : vector<8x128xf32>
    %c7_i32 = arith.constant 7 : i32
    %297 = vector.broadcast %c7_i32 : i32 to vector<8x1xi32>
    %298 = arith.cmpi eq, %17, %297 : vector<8x1xi32>
    %299 = vector.shape_cast %298 : vector<8x1xi1> to vector<8x1xi1>
    %300 = vector.broadcast %299 : vector<8x1xi1> to vector<8x128xi1>
    %301 = arith.select %300, %296, %260 : vector<8x128xi1>, vector<8x128xf32>
    %c48_86 = arith.constant 48 : index
    %c0_87 = arith.constant 0 : index
    %302 = vector.load %arg14[%c48_86, %c0_87] : memref<64x128xf32, #tpu.memory_space<vmem>>, vector<8x128xf32>
    %cst_88 = arith.constant 0.000000e+00 : f32
    %303 = vector.broadcast %cst_88 : f32 to vector<8x128xf32>
    %304 = arith.maximumf %296, %303 : vector<8x128xf32>
    %305 = arith.addf %302, %304 : vector<8x128xf32>
    %c48_89 = arith.constant 48 : index
    %c0_90 = arith.constant 0 : index
    %306 = vector.load %arg15[%c48_89, %c0_90] : memref<64x128xf32, #tpu.memory_space<vmem>>, vector<8x128xf32>
    tpu.vector_store %arg15[%c48_89, %c0_90], %305 {strides = array<i32>} : memref<64x128xf32, #tpu.memory_space<vmem>>, vector<8x128xf32>,
    %c56 = arith.constant 56 : index
    %c0_91 = arith.constant 0 : index
    %307 = vector.load %arg16[%c56, %c0_91] : memref<64x384xf32, #tpu.memory_space<vmem>>, vector<8x384xf32>
    %308 = arith.truncf %296 : vector<8x128xf32> to vector<8x128xbf16>
    %cst_92 = arith.constant dense<0.000000e+00> : vector<8x384xf32>
    %309 = tpu.matmul %308, %6, %cst_92 {dimension_numbers = #tpu.dot_dimension_numbers<[1], [0], [0], [1], [0, 0, 1, 1], [], []>} : vector<8x128xbf16>, vector<128x384xbf16>, vector<8x384xf32> -> vector<8x384xf32>
    %310 = vector.extract_strided_slice %307 {offsets = [0, 0], sizes = [8, 128], strides = [1, 1]} : vector<8x384xf32> to vector<8x128xf32>
    %311 = vector.extract_strided_slice %309 {offsets = [0, 0], sizes = [8, 128], strides = [1, 1]} : vector<8x384xf32> to vector<8x128xf32>
    %312 = arith.addf %310, %311 : vector<8x128xf32>
    %313 = arith.negf %312 : vector<8x128xf32>
    %314 = math.exp %313 : vector<8x128xf32>
    %cst_93 = arith.constant 1.000000e+00 : f32
    %315 = vector.broadcast %cst_93 : f32 to vector<8x128xf32>
    %316 = arith.addf %315, %314 : vector<8x128xf32>
    %317 = arith.divf %315, %316 : vector<8x128xf32>
    %318 = vector.extract_strided_slice %307 {offsets = [0, 128], sizes = [8, 128], strides = [1, 1]} : vector<8x384xf32> to vector<8x128xf32>
    %319 = vector.extract_strided_slice %309 {offsets = [0, 128], sizes = [8, 128], strides = [1, 1]} : vector<8x384xf32> to vector<8x128xf32>
    %320 = arith.addf %318, %319 : vector<8x128xf32>
    %321 = arith.negf %320 : vector<8x128xf32>
    %322 = math.exp %321 : vector<8x128xf32>
    %cst_94 = arith.constant 1.000000e+00 : f32
    %323 = vector.broadcast %cst_94 : f32 to vector<8x128xf32>
    %324 = arith.addf %323, %322 : vector<8x128xf32>
    %325 = arith.divf %323, %324 : vector<8x128xf32>
    %326 = vector.extract_strided_slice %307 {offsets = [0, 256], sizes = [8, 128], strides = [1, 1]} : vector<8x384xf32> to vector<8x128xf32>
    %327 = vector.extract_strided_slice %309 {offsets = [0, 256], sizes = [8, 128], strides = [1, 1]} : vector<8x384xf32> to vector<8x128xf32>
    %328 = vector.broadcast %10 : vector<1x128xf32> to vector<8x128xf32>
    %329 = arith.addf %327, %328 : vector<8x128xf32>
    %330 = arith.mulf %317, %329 : vector<8x128xf32>
    %331 = arith.addf %326, %330 : vector<8x128xf32>
    %332 = math.tanh %331 : vector<8x128xf32>
    %cst_95 = arith.constant 1.000000e+00 : f32
    %333 = vector.broadcast %cst_95 : f32 to vector<8x128xf32>
    %334 = arith.subf %333, %325 : vector<8x128xf32>
    %335 = arith.mulf %334, %332 : vector<8x128xf32>
    %336 = arith.mulf %325, %296 : vector<8x128xf32>
    %337 = arith.addf %335, %336 : vector<8x128xf32>
    %c8_i32 = arith.constant 8 : i32
    %338 = vector.broadcast %c8_i32 : i32 to vector<8x1xi32>
    %339 = arith.cmpi eq, %17, %338 : vector<8x1xi32>
    %340 = vector.shape_cast %339 : vector<8x1xi1> to vector<8x1xi1>
    %341 = vector.broadcast %340 : vector<8x1xi1> to vector<8x128xi1>
    %342 = arith.select %341, %337, %301 : vector<8x128xi1>, vector<8x128xf32>
    %c56_96 = arith.constant 56 : index
    %c0_97 = arith.constant 0 : index
    %343 = vector.load %arg14[%c56_96, %c0_97] : memref<64x128xf32, #tpu.memory_space<vmem>>, vector<8x128xf32>
    %cst_98 = arith.constant 0.000000e+00 : f32
    %344 = vector.broadcast %cst_98 : f32 to vector<8x128xf32>
    %345 = arith.maximumf %337, %344 : vector<8x128xf32>
    %346 = arith.addf %343, %345 : vector<8x128xf32>
    %c56_99 = arith.constant 56 : index
    %c0_100 = arith.constant 0 : index
    %347 = vector.load %arg15[%c56_99, %c0_100] : memref<64x128xf32, #tpu.memory_space<vmem>>, vector<8x128xf32>
    tpu.vector_store %arg15[%c56_99, %c0_100], %346 {strides = array<i32>} : memref<64x128xf32, #tpu.memory_space<vmem>>, vector<8x128xf32>,
    %c1_i32_101 = arith.constant 1 : i32
    %348 = arith.cmpi eq, %arg0, %c1_i32_101 : i32
    %349 = arith.extui %348 : i1 to i32
    %c0_i32_102 = arith.constant 0 : i32
    %350 = arith.cmpi ne, %349, %c0_i32_102 : i32
    scf.if %350 {
      %351 = math.tanh %342 : vector<8x128xf32>
      %c0_103 = arith.constant 0 : index
      %c0_104 = arith.constant 0 : index
      %352 = vector.load %arg13[%c0_103, %c0_104] : memref<8x128xf32, #tpu.memory_space<vmem>>, vector<8x128xf32>
      tpu.vector_store %arg13[%c0_103, %c0_104], %351 {strides = array<i32>} : memref<8x128xf32, #tpu.memory_space<vmem>>, vector<8x128xf32>,
    } else {
    }
    return
  }
  func.func @transform_0(%arg0: i32) -> (i32, i32) {
    %c0_i32 = arith.constant 0 : i32
    %c0_i32_0 = arith.constant 0 : i32
    %c0_i32_1 = arith.constant 0 : i32
    return %c0_i32, %c0_i32_0 : i32, i32
  }
  func.func @transform_1(%arg0: i32) -> (i32, i32) {
    %c0_i32 = arith.constant 0 : i32
    %c0_i32_0 = arith.constant 0 : i32
    %c0_i32_1 = arith.constant 0 : i32
    return %c0_i32, %c0_i32_0 : i32, i32
  }
  func.func @transform_2(%arg0: i32) -> (i32, i32) {
    %c0_i32 = arith.constant 0 : i32
    %c0_i32_0 = arith.constant 0 : i32
    %c0_i32_1 = arith.constant 0 : i32
    return %c0_i32, %c0_i32_0 : i32, i32
  }
  func.func @transform_3(%arg0: i32) -> (i32, i32) {
    %c0_i32 = arith.constant 0 : i32
    %c0_i32_0 = arith.constant 0 : i32
    %c0_i32_1 = arith.constant 0 : i32
    return %c0_i32, %c0_i32_0 : i32, i32
  }
  func.func @transform_4(%arg0: i32) -> (i32, i32) {
    %c0_i32 = arith.constant 0 : i32
    %c0_i32_0 = arith.constant 0 : i32
    %c0_i32_1 = arith.constant 0 : i32
    return %c0_i32, %c0_i32_0 : i32, i32
  }
  func.func @transform_5(%arg0: i32) -> (i32, i32) {
    %c0_i32 = arith.constant 0 : i32
    %c0_i32_0 = arith.constant 0 : i32
    %c0_i32_1 = arith.constant 0 : i32
    return %c0_i32, %c0_i32_0 : i32, i32
  }
  func.func @transform_6(%arg0: i32) -> (i32, i32) {
    %c0_i32 = arith.constant 0 : i32
    %c0_i32_0 = arith.constant 0 : i32
    %c0_i32_1 = arith.constant 0 : i32
    return %c0_i32, %c0_i32_0 : i32, i32
  }
  func.func @transform_7(%arg0: i32) -> (i32, i32) {
    %c0_i32 = arith.constant 0 : i32
    %c0_i32_0 = arith.constant 0 : i32
    %c0_i32_1 = arith.constant 0 : i32
    return %c0_i32, %c0_i32_0 : i32, i32
  }
  func.func @transform_8(%arg0: i32) -> (i32, i32, i32) {
    %c0_i32 = arith.constant 0 : i32
    %c0_i32_0 = arith.constant 0 : i32
    %c0_i32_1 = arith.constant 0 : i32
    return %arg0, %c0_i32, %c0_i32_0 : i32, i32, i32
  }
  func.func @transform_9(%arg0: i32) -> (i32, i32, i32) {
    %c0_i32 = arith.constant 0 : i32
    %c0_i32_0 = arith.constant 0 : i32
    %c0_i32_1 = arith.constant 0 : i32
    return %arg0, %c0_i32, %c0_i32_0 : i32, i32, i32
  }
  func.func @transform_10(%arg0: i32) -> (i32, i32, i32) {
    %c0_i32 = arith.constant 0 : i32
    %c0_i32_0 = arith.constant 0 : i32
    %c0_i32_1 = arith.constant 0 : i32
    return %arg0, %c0_i32, %c0_i32_0 : i32, i32, i32
  }
  func.func @transform_11(%arg0: i32) -> (i32, i32, i32) {
    %c0_i32 = arith.constant 0 : i32
    %c0_i32_0 = arith.constant 0 : i32
    %c0_i32_1 = arith.constant 0 : i32
    return %arg0, %c0_i32, %c0_i32_0 : i32, i32, i32
  }
  func.func @transform_12(%arg0: i32) -> (i32, i32) {
    %c0_i32 = arith.constant 0 : i32
    %c0_i32_0 = arith.constant 0 : i32
    %c0_i32_1 = arith.constant 0 : i32
    return %c0_i32, %c0_i32_0 : i32, i32
  }
}

</mosaic_0001>

<llo_original>
// kernel: tpu_custom_call.1
$region0: #{tpu_custom_call.1}
  #allocation0 [shape = 'u32[]', space=smem, size = 0x4, offset = 0x4, fixed_abs, tag = 'smem constant byte address 0x4 - core index']
  #allocation1 [shape = 'u32[72,128]{1,0:T(1,128)}', space=vmem, size = 0x9000, scoped, tag = 'internal scratch']
  #allocation2 [shape = 'f32[64,128]{1,0:T(8,128)}', space=vmem, size = 0x8000, scoped, tag = 'scratch operand']
  #allocation3 [shape = 'f32[64,128]{1,0:T(8,128)}', space=vmem, size = 0x8000, scoped, tag = 'scratch operand']
  #allocation4 [shape = 'f32[64,384]{1,0:T(8,128)}', space=vmem, size = 0x18000, scoped, tag = 'scratch operand']
  %s0 = inlined_call_operand.vmem [shape: bf16[32,32], index: 0, kind: input, shape index: {}]
  %s1 = inlined_call_operand.vmem [shape: bf16[64,32], index: 1, kind: input, shape index: {}]
  %s2 = inlined_call_operand.vmem [shape: bf16[32,128], index: 2, kind: input, shape index: {}]
  %s3 = inlined_call_operand.hbm [shape: bf16[128,128], index: 3, kind: input, shape index: {}]
  %s4 = inlined_call_operand.vmem [shape: f32[1,128], index: 4, kind: input, shape index: {}]
  %s5 = inlined_call_operand.hbm [shape: bf16[128,128], index: 5, kind: input, shape index: {}]
  %s6 = inlined_call_operand.vmem [shape: f32[1,128], index: 6, kind: input, shape index: {}]
  %s7 = inlined_call_operand.vmem [shape: s32[8,1], index: 7, kind: input, shape index: {}]
  %s8 = inlined_call_operand.hbm [shape: bf16[2,128,384], index: 8, kind: input, shape index: {}]
  %s9 = inlined_call_operand.hbm [shape: bf16[2,128,384], index: 9, kind: input, shape index: {}]
  %s10 = inlined_call_operand.vmem [shape: f32[2,1,384], index: 10, kind: input, shape index: {}]
  %s11 = inlined_call_operand.vmem [shape: f32[2,1,128], index: 11, kind: input, shape index: {}]
  %s12 = inlined_call_operand.hbm [shape: f32[8,128], index: 12, kind: output, shape index: {}]
  %s13 = sld [smem:[#allocation0]]
  $region105: #{tpu_custom_call.1} parent=0
    _
  %s15 = ssub.s32 1, %s13
  %s16 = scalar_select 0, %s15, %s13
  $region1: #{tpu_custom_call.1} parent=0
    #allocation5 [shape = 'u8[32768]{0}', space=vmem, size = 0x8000, scoped, tag = 'input window, operand 3, single buffered']
    #allocation6 [shape = 's32[2]{0}', space=sflag, size = 0x8, scoped, tag = 'scoped memory for tpu_custom_call.1']
    #allocation7 [shape = 's32[2]{0}', space=sflag, size = 0x8, scoped, tag = 'scoped memory for tpu_custom_call.1']
    #allocation8 [shape = 'u8[32768]{0}', space=vmem, size = 0x8000, scoped, tag = 'input window, operand 5, single buffered']
    #allocation9 [shape = 's32[1]{0}', space=sflag, size = 0x4, scoped, tag = 'scoped memory for tpu_custom_call.1']
    #allocation10 [shape = 'u8[196608]{0}', space=vmem, size = 0x30000, scoped, tag = 'input window, operand 8']
    #allocation11 [shape = 'u8[196608]{0}', space=vmem, size = 0x30000, scoped, tag = 'input window, operand 9']
    #allocation12 [shape = 'u8[4096]{0}', space=vmem, size = 0x1000, scoped, tag = 'output window, operand 0, single buffered']
    %17 = vsyncpa [#allocation6], 0
    %18 = vsyncpa [#allocation9], 0
    %19 = vsyncpa [#allocation7], 0
    loop: start=0, step=1, limit=4
    $region2: #{tpu_custom_call.1} parent=1 // loop_pre_header
      _
    $region3: #{tpu_custom_call.1} parent=1 // loop_header
      %s21 = sphi 0, %s25
      %p22 = scmp.ge.s32.totalorder %s21, 4
      %s29 = sphi 0, %s29
      %s31 = sphi 0, %s29
      %s32 = sphi 0, %s31
      %s46 = sphi 0, %s32
      %s50 = sphi 0, %s50
      %s52 = sphi 0, %s50
      %s53 = sphi 0, %s52
      %s67 = sphi 0, %s53
      %s71 = sphi 0, %s71
      %s73 = sphi 0, %s71
      %s74 = sphi 0, %s73
      %s88 = sphi 0, %s74
      %s92 = sphi 0, %s92
      %s94 = sphi 0, %s92
      %s95 = sphi 0, %s94
      %s109 = sphi 0, %s95
      %s113 = sphi 0, %s113
      %s115 = sphi 0, %s113
      %s116 = sphi 0, %s115
      %s130 = sphi 0, %s116
      %s134 = sphi 0, %s134
      %s136 = sphi 0, %s134
      %s137 = sphi 0, %s136
      %s151 = sphi 0, %s137
      %s155 = sphi 0, %s155
      %s157 = sphi 0, %s155
      %s158 = sphi 0, %s157
      %s172 = sphi 0, %s158
      %s176 = sphi 0, %s176
      %s178 = sphi 0, %s176
      %s179 = sphi 0, %s178
      %s193 = sphi 0, %s179
      %s199 = sphi 0, %s201
      %s202 = sphi 0, %s199
      %s203 = sphi 0, %s202
      %s219 = sphi 0, %s203
      %s225 = sphi 0, %s227
      %s228 = sphi 0, %s225
      %s229 = sphi 0, %s228
      %s245 = sphi 0, %s229
      %s251 = sphi 0, %s253
      %s254 = sphi 0, %s251
      %s255 = sphi 0, %s254
      %s271 = sphi 0, %s255
      %s277 = sphi 0, %s279
      %s280 = sphi 0, %s277
      %s281 = sphi 0, %s280
      %s297 = sphi 0, %s281
      %s301 = sphi 0, %s301
      %s303 = sphi 0, %s301
      %s304 = sphi 0, %s303
      %s318 = sphi 0, %s304
    $region4: #{tpu_custom_call.1} parent=1 // loop_header_branch
      %24 = sbr.rel (%p22) target = $region8
    $region5: #{tpu_custom_call.1} parent=1 // loop_body
      %s26 = ssub.s32 %s21, 1
      %s27 = ssub.s32 %s21, 2
      %s28 = sadd.s32 %s21, 1
      %s30 = sadd.s32 %s29, 1
      %p33 = scmp.eq.s32.totalorder %s21, 1
      %p34 = scmp.ne.s32.totalorder %s29, %s31
      %p35 = scmp.eq.s32.totalorder %s21, 0
      %p36 = por %p34, %p35
      %p37 = scmp.ne.s32.totalorder %s29, %s31
      %p38 = scmp.eq.s32.totalorder %s26, 1
      %p39 = por %p37, %p38
      %p40 = scmp.ne.s32.totalorder %s31, %s32
      %p41 = scmp.eq.s32.totalorder %s26, 0
      %p42 = por %p40, %p41
      %p43 = scmp.ne.s32.totalorder %s31, %s32
      %p44 = scmp.eq.s32.totalorder %s27, 1
      %p45 = por %p43, %p44
      %p47 = scmp.ne.s32.totalorder %s32, %s46
      %p48 = scmp.eq.s32.totalorder %s27, 0
      %p49 = por %p47, %p48
      %s51 = sadd.s32 %s50, 1
      %p54 = scmp.eq.s32.totalorder %s21, 1
      %p55 = scmp.ne.s32.totalorder %s50, %s52
      %p56 = scmp.eq.s32.totalorder %s21, 0
      %p57 = por %p55, %p56
      %p58 = scmp.ne.s32.totalorder %s50, %s52
      %p59 = scmp.eq.s32.totalorder %s26, 1
      %p60 = por %p58, %p59
      %p61 = scmp.ne.s32.totalorder %s52, %s53
      %p62 = scmp.eq.s32.totalorder %s26, 0
      %p63 = por %p61, %p62
      %p64 = scmp.ne.s32.totalorder %s52, %s53
      %p65 = scmp.eq.s32.totalorder %s27, 1
      %p66 = por %p64, %p65
      %p68 = scmp.ne.s32.totalorder %s53, %s67
      %p69 = scmp.eq.s32.totalorder %s27, 0
      %p70 = por %p68, %p69
      %s72 = sadd.s32 %s71, 1
      %p75 = scmp.eq.s32.totalorder %s21, 1
      %p76 = scmp.ne.s32.totalorder %s71, %s73
      %p77 = scmp.eq.s32.totalorder %s21, 0
      %p78 = por %p76, %p77
      %p79 = scmp.ne.s32.totalorder %s71, %s73
      %p80 = scmp.eq.s32.totalorder %s26, 1
      %p81 = por %p79, %p80
      %p82 = scmp.ne.s32.totalorder %s73, %s74
      %p83 = scmp.eq.s32.totalorder %s26, 0
      %p84 = por %p82, %p83
      %p85 = scmp.ne.s32.totalorder %s73, %s74
      %p86 = scmp.eq.s32.totalorder %s27, 1
      %p87 = por %p85, %p86
      %p89 = scmp.ne.s32.totalorder %s74, %s88
      %p90 = scmp.eq.s32.totalorder %s27, 0
      %p91 = por %p89, %p90
      %s93 = sadd.s32 %s92, 1
      %p96 = scmp.eq.s32.totalorder %s21, 1
      %p97 = scmp.ne.s32.totalorder %s92, %s94
      %p98 = scmp.eq.s32.totalorder %s21, 0
      %p99 = por %p97, %p98
      %p100 = scmp.ne.s32.totalorder %s92, %s94
      %p101 = scmp.eq.s32.totalorder %s26, 1
      %p102 = por %p100, %p101
      %p103 = scmp.ne.s32.totalorder %s94, %s95
      %p104 = scmp.eq.s32.totalorder %s26, 0
      %p105 = por %p103, %p104
      %p106 = scmp.ne.s32.totalorder %s94, %s95
      %p107 = scmp.eq.s32.totalorder %s27, 1
      %p108 = por %p106, %p107
      %p110 = scmp.ne.s32.totalorder %s95, %s109
      %p111 = scmp.eq.s32.totalorder %s27, 0
      %p112 = por %p110, %p111
      %s114 = sadd.s32 %s113, 1
      %p117 = scmp.eq.s32.totalorder %s21, 1
      %p118 = scmp.ne.s32.totalorder %s113, %s115
      %p119 = scmp.eq.s32.totalorder %s21, 0
      %p120 = por %p118, %p119
      %p121 = scmp.ne.s32.totalorder %s113, %s115
      %p122 = scmp.eq.s32.totalorder %s26, 1
      %p123 = por %p121, %p122
      %p124 = scmp.ne.s32.totalorder %s115, %s116
      %p125 = scmp.eq.s32.totalorder %s26, 0
      %p126 = por %p124, %p125
      %p127 = scmp.ne.s32.totalorder %s115, %s116
      %p128 = scmp.eq.s32.totalorder %s27, 1
      %p129 = por %p127, %p128
      %p131 = scmp.ne.s32.totalorder %s116, %s130
      %p132 = scmp.eq.s32.totalorder %s27, 0
      %p133 = por %p131, %p132
      %s135 = sadd.s32 %s134, 1
      %p138 = scmp.eq.s32.totalorder %s21, 1
      %p139 = scmp.ne.s32.totalorder %s134, %s136
      %p140 = scmp.eq.s32.totalorder %s21, 0
      %p141 = por %p139, %p140
      %p142 = scmp.ne.s32.totalorder %s134, %s136
      %p143 = scmp.eq.s32.totalorder %s26, 1
      %p144 = por %p142, %p143
      %p145 = scmp.ne.s32.totalorder %s136, %s137
      %p146 = scmp.eq.s32.totalorder %s26, 0
      %p147 = por %p145, %p146
      %p148 = scmp.ne.s32.totalorder %s136, %s137
      %p149 = scmp.eq.s32.totalorder %s27, 1
      %p150 = por %p148, %p149
      %p152 = scmp.ne.s32.totalorder %s137, %s151
      %p153 = scmp.eq.s32.totalorder %s27, 0
      %p154 = por %p152, %p153
      %s156 = sadd.s32 %s155, 1
      %p159 = scmp.eq.s32.totalorder %s21, 1
      %p160 = scmp.ne.s32.totalorder %s155, %s157
      %p161 = scmp.eq.s32.totalorder %s21, 0
      %p162 = por %p160, %p161
      %p163 = scmp.ne.s32.totalorder %s155, %s157
      %p164 = scmp.eq.s32.totalorder %s26, 1
      %p165 = por %p163, %p164
      %p166 = scmp.ne.s32.totalorder %s157, %s158
      %p167 = scmp.eq.s32.totalorder %s26, 0
      %p168 = por %p166, %p167
      %p169 = scmp.ne.s32.totalorder %s157, %s158
      %p170 = scmp.eq.s32.totalorder %s27, 1
      %p171 = por %p169, %p170
      %p173 = scmp.ne.s32.totalorder %s158, %s172
      %p174 = scmp.eq.s32.totalorder %s27, 0
      %p175 = por %p173, %p174
      %s177 = sadd.s32 %s176, 1
      %p180 = scmp.eq.s32.totalorder %s21, 1
      %p181 = scmp.ne.s32.totalorder %s176, %s178
      %p182 = scmp.eq.s32.totalorder %s21, 0
      %p183 = por %p181, %p182
      %p184 = scmp.ne.s32.totalorder %s176, %s178
      %p185 = scmp.eq.s32.totalorder %s26, 1
      %p186 = por %p184, %p185
      %p187 = scmp.ne.s32.totalorder %s178, %s179
      %p188 = scmp.eq.s32.totalorder %s26, 0
      %p189 = por %p187, %p188
      %p190 = scmp.ne.s32.totalorder %s178, %s179
      %p191 = scmp.eq.s32.totalorder %s27, 1
      %p192 = por %p190, %p191
      %p194 = scmp.ne.s32.totalorder %s179, %s193
      %p195 = scmp.eq.s32.totalorder %s27, 0
      %p196 = por %p194, %p195
      %s197 = ssub.s32 %s21, %s28
      %p198 = scmp.eq.s32.totalorder %s197, 0
      %s200 = sadd.s32 %s199, 1
      %s201 = scalar_select %p198, %s199, %s200
      %p204 = pneg %p198
      %p205 = scmp.eq.s32.totalorder %s21, 1
      %p206 = por %p204, %p205
      %p207 = scmp.ne.s32.totalorder %s199, %s202
      %p208 = scmp.eq.s32.totalorder %s21, 0
      %p209 = por %p207, %p208
      %p210 = scmp.ne.s32.totalorder %s199, %s202
      %p211 = scmp.eq.s32.totalorder %s26, 1
      %p212 = por %p210, %p211
      %p213 = scmp.ne.s32.totalorder %s202, %s203
      %p214 = scmp.eq.s32.totalorder %s26, 0
      %p215 = por %p213, %p214
      %p216 = scmp.ne.s32.totalorder %s202, %s203
      %p217 = scmp.eq.s32.totalorder %s27, 1
      %p218 = por %p216, %p217
      %p220 = scmp.ne.s32.totalorder %s203, %s219
      %p221 = scmp.eq.s32.totalorder %s27, 0
      %p222 = por %p220, %p221
      %s223 = ssub.s32 %s21, %s28
      %p224 = scmp.eq.s32.totalorder %s223, 0
      %s226 = sadd.s32 %s225, 1
      %s227 = scalar_select %p224, %s225, %s226
      %p230 = pneg %p224
      %p231 = scmp.eq.s32.totalorder %s21, 1
      %p232 = por %p230, %p231
      %p233 = scmp.ne.s32.totalorder %s225, %s228
      %p234 = scmp.eq.s32.totalorder %s21, 0
      %p235 = por %p233, %p234
      %p236 = scmp.ne.s32.totalorder %s225, %s228
      %p237 = scmp.eq.s32.totalorder %s26, 1
      %p238 = por %p236, %p237
      %p239 = scmp.ne.s32.totalorder %s228, %s229
      %p240 = scmp.eq.s32.totalorder %s26, 0
      %p241 = por %p239, %p240
      %p242 = scmp.ne.s32.totalorder %s228, %s229
      %p243 = scmp.eq.s32.totalorder %s27, 1
      %p244 = por %p242, %p243
      %p246 = scmp.ne.s32.totalorder %s229, %s245
      %p247 = scmp.eq.s32.totalorder %s27, 0
      %p248 = por %p246, %p247
      %s249 = ssub.s32 %s21, %s28
      %p250 = scmp.eq.s32.totalorder %s249, 0
      %s252 = sadd.s32 %s251, 1
      %s253 = scalar_select %p250, %s251, %s252
      %p256 = pneg %p250
      %p257 = scmp.eq.s32.totalorder %s21, 1
      %p258 = por %p256, %p257
      %p259 = scmp.ne.s32.totalorder %s251, %s254
      %p260 = scmp.eq.s32.totalorder %s21, 0
      %p261 = por %p259, %p260
      %p262 = scmp.ne.s32.totalorder %s251, %s254
      %p263 = scmp.eq.s32.totalorder %s26, 1
      %p264 = por %p262, %p263
      %p265 = scmp.ne.s32.totalorder %s254, %s255
      %p266 = scmp.eq.s32.totalorder %s26, 0
      %p267 = por %p265, %p266
      %p268 = scmp.ne.s32.totalorder %s254, %s255
      %p269 = scmp.eq.s32.totalorder %s27, 1
      %p270 = por %p268, %p269
      %p272 = scmp.ne.s32.totalorder %s255, %s271
      %p273 = scmp.eq.s32.totalorder %s27, 0
      %p274 = por %p272, %p273
      %s275 = ssub.s32 %s21, %s28
      %p276 = scmp.eq.s32.totalorder %s275, 0
      %s278 = sadd.s32 %s277, 1
      %s279 = scalar_select %p276, %s277, %s278
      %p282 = pneg %p276
      %p283 = scmp.eq.s32.totalorder %s21, 1
      %p284 = por %p282, %p283
      %p285 = scmp.ne.s32.totalorder %s277, %s280
      %p286 = scmp.eq.s32.totalorder %s21, 0
      %p287 = por %p285, %p286
      %p288 = scmp.ne.s32.totalorder %s277, %s280
      %p289 = scmp.eq.s32.totalorder %s26, 1
      %p290 = por %p288, %p289
      %p291 = scmp.ne.s32.totalorder %s280, %s281
      %p292 = scmp.eq.s32.totalorder %s26, 0
      %p293 = por %p291, %p292
      %p294 = scmp.ne.s32.totalorder %s280, %s281
      %p295 = scmp.eq.s32.totalorder %s27, 1
      %p296 = por %p294, %p295
      %p298 = scmp.ne.s32.totalorder %s281, %s297
      %p299 = scmp.eq.s32.totalorder %s27, 0
      %p300 = por %p298, %p299
      %s302 = sadd.s32 %s301, 1
      %p305 = scmp.eq.s32.totalorder %s21, 1
      %p306 = scmp.ne.s32.totalorder %s301, %s303
      %p307 = scmp.eq.s32.totalorder %s21, 0
      %p308 = por %p306, %p307
      %p309 = scmp.ne.s32.totalorder %s301, %s303
      %p310 = scmp.eq.s32.totalorder %s26, 1
      %p311 = por %p309, %p310
      %p312 = scmp.ne.s32.totalorder %s303, %s304
      %p313 = scmp.eq.s32.totalorder %s26, 0
      %p314 = por %p312, %p313
      %p315 = scmp.ne.s32.totalorder %s303, %s304
      %p316 = scmp.eq.s32.totalorder %s27, 1
      %p317 = por %p315, %p316
      %p319 = scmp.ne.s32.totalorder %s304, %s318
      %p320 = scmp.eq.s32.totalorder %s27, 0
      %p321 = por %p319, %p320
      %p322 = scmp.le.s32.totalorder 1, %s21
      %p323 = scmp.lt.s32.totalorder %s21, 3
      %p324 = pnand %p322, %p323
      %p325 = pneg %p324
      // Predicated region
      $region9: #{tpu_custom_call.1} parent=5 // pred_check
        _
      $region10: #{tpu_custom_call.1} parent=5 // pred_check_branch
        %327 = sbr.rel (%p324) target = $region12
      $region11: #{tpu_custom_call.1} parent=5 // pred_region
        %s328 = ssub.s32 %s21, 1
        // Predicated region
        $region13: #{tpu_custom_call.1} parent=11 // pred_check
          %p329 = pneg %p42
        $region14: #{tpu_custom_call.1} parent=11 // pred_check_branch
          %331 = sbr.rel (%p329) target = $region16
        $region15: #{tpu_custom_call.1} parent=11 // pred_region
          _
        $region16: #{tpu_custom_call.1} parent=11 // pred_fallthru
          _
        // Predicated region
        $region17: #{tpu_custom_call.1} parent=11 // pred_check
          %p332 = pneg %p63
        $region18: #{tpu_custom_call.1} parent=11 // pred_check_branch
          %334 = sbr.rel (%p332) target = $region20
        $region19: #{tpu_custom_call.1} parent=11 // pred_region
          _
        $region20: #{tpu_custom_call.1} parent=11 // pred_fallthru
          _
        // Predicated region
        $region21: #{tpu_custom_call.1} parent=11 // pred_check
          %p335 = pneg %p84
        $region22: #{tpu_custom_call.1} parent=11 // pred_check_branch
          %337 = sbr.rel (%p335) target = $region24
        $region23: #{tpu_custom_call.1} parent=11 // pred_region
          _
        $region24: #{tpu_custom_call.1} parent=11 // pred_fallthru
          _
        // Predicated region
        $region25: #{tpu_custom_call.1} parent=11 // pred_check
          %p338 = pneg %p105
        $region26: #{tpu_custom_call.1} parent=11 // pred_check_branch
          %340 = sbr.rel (%p338) target = $region28
        $region27: #{tpu_custom_call.1} parent=11 // pred_region
          %342 = vsyncadd [#allocation6], 0
          %s343 = sshll.u32 %s3, 4
          %s344 = int_to_ptr.hbm [resolvable:$true] %s343
          %s345 = sshll.u32 [#allocation5], 4
          %s346 = int_to_ptr.vmem [resolvable:$true] %s345
          %351 = dma.hbm_to_vmem [thread:$0]  %s344, 1024, %s346, [#allocation6], 64, 64, 4
        $region28: #{tpu_custom_call.1} parent=11 // pred_fallthru
          _
        // Predicated region
        $region29: #{tpu_custom_call.1} parent=11 // pred_check
          %p352 = pneg %p126
        $region30: #{tpu_custom_call.1} parent=11 // pred_check_branch
          %354 = sbr.rel (%p352) target = $region32
        $region31: #{tpu_custom_call.1} parent=11 // pred_region
          _
        $region32: #{tpu_custom_call.1} parent=11 // pred_fallthru
          _
        // Predicated region
        $region33: #{tpu_custom_call.1} parent=11 // pred_check
          %p355 = pneg %p147
        $region34: #{tpu_custom_call.1} parent=11 // pred_check_branch
          %357 = sbr.rel (%p355) target = $region36
        $region35: #{tpu_custom_call.1} parent=11 // pred_region
          %359 = vsyncadd [#allocation9], 0
          %s360 = sshll.u32 %s5, 4
          %s361 = int_to_ptr.hbm [resolvable:$true] %s360
          %s362 = sshll.u32 [#allocation8], 4
          %s363 = int_to_ptr.vmem [resolvable:$true] %s362
          %368 = dma.hbm_to_vmem [thread:$0]  %s361, 1024, %s363, [#allocation9], 64, 64, 4
        $region36: #{tpu_custom_call.1} parent=11 // pred_fallthru
          _
        // Predicated region
        $region37: #{tpu_custom_call.1} parent=11 // pred_check
          %p369 = pneg %p168
        $region38: #{tpu_custom_call.1} parent=11 // pred_check_branch
          %371 = sbr.rel (%p369) target = $region40
        $region39: #{tpu_custom_call.1} parent=11 // pred_region
          _
        $region40: #{tpu_custom_call.1} parent=11 // pred_fallthru
          _
        // Predicated region
        $region41: #{tpu_custom_call.1} parent=11 // pred_check
          %p372 = pneg %p189
        $region42: #{tpu_custom_call.1} parent=11 // pred_check_branch
          %374 = sbr.rel (%p372) target = $region44
        $region43: #{tpu_custom_call.1} parent=11 // pred_region
          _
        $region44: #{tpu_custom_call.1} parent=11 // pred_fallthru
          _
      $region12: #{tpu_custom_call.1} parent=5 // pred_fallthru
        _
      %p375 = scmp.lt.s32.totalorder %s21, 2
      // Predicated region
      $region45: #{tpu_custom_call.1} parent=5 // pred_check
        %p376 = pneg %p375
      $region46: #{tpu_custom_call.1} parent=5 // pred_check_branch
        %378 = sbr.rel (%p376) target = $region48
      $region47: #{tpu_custom_call.1} parent=5 // pred_region
        // Predicated region
        $region49: #{tpu_custom_call.1} parent=47 // pred_check
          %p379 = pneg %p209
        $region50: #{tpu_custom_call.1} parent=47 // pred_check_branch
          %381 = sbr.rel (%p379) target = $region52
        $region51: #{tpu_custom_call.1} parent=47 // pred_region
          %s382 = sand.u32 %s21, 1
          %s383 = scalar_lea.sflag [#allocation6], %s382
          %s384 = sand.u32 %s199, 1
          %s385 = smul.addr %s384, 192
          %s386 = scalar_lea.vmem [#allocation10], %s385
          %388 = vsyncadd %s383, 0
          %s389 = smul.addr %s21, 48
          %s390 = smul.addr %s389, 4
          %s391 = scalar_lea.hbm %s8, %s390
          %s392 = sshll.u32 %s391, 4
          %s393 = int_to_ptr.hbm [resolvable:$true] %s392
          %s394 = sshll.u32 %s386, 4
          %s395 = int_to_ptr.vmem [resolvable:$true] %s394
          %400 = dma.hbm_to_vmem [thread:$0]  %s393, 3072, %s395, %s383, 192, 192, 12
        $region52: #{tpu_custom_call.1} parent=47 // pred_fallthru
          _
        // Predicated region
        $region53: #{tpu_custom_call.1} parent=47 // pred_check
          %p401 = pneg %p235
        $region54: #{tpu_custom_call.1} parent=47 // pred_check_branch
          %403 = sbr.rel (%p401) target = $region56
        $region55: #{tpu_custom_call.1} parent=47 // pred_region
          %s404 = sand.u32 %s21, 1
          %s405 = scalar_lea.sflag [#allocation6], %s404
          %s406 = sand.u32 %s225, 1
          %s407 = smul.addr %s406, 192
          %s408 = scalar_lea.vmem [#allocation11], %s407
          %410 = vsyncadd %s405, 0
          %s411 = smul.addr %s21, 48
          %s412 = smul.addr %s411, 4
          %s413 = scalar_lea.hbm %s9, %s412
          %s414 = sshll.u32 %s413, 4
          %s415 = int_to_ptr.hbm [resolvable:$true] %s414
          %s416 = sshll.u32 %s408, 4
          %s417 = int_to_ptr.vmem [resolvable:$true] %s416
          %422 = dma.hbm_to_vmem [thread:$0]  %s415, 3072, %s417, %s405, 192, 192, 12
        $region56: #{tpu_custom_call.1} parent=47 // pred_fallthru
          _
        // Predicated region
        $region57: #{tpu_custom_call.1} parent=47 // pred_check
          %p423 = pneg %p261
        $region58: #{tpu_custom_call.1} parent=47 // pred_check_branch
          %425 = sbr.rel (%p423) target = $region60
        $region59: #{tpu_custom_call.1} parent=47 // pred_region
          %p426 = scmp.lt.s32.totalorder %s21, 1
          %s427 = scalar_select %p426, %s21, 1
          %s428 = smul.addr %s427, 3
          %s429 = scalar_lea.vmem %s10, %s428
        $region60: #{tpu_custom_call.1} parent=47 // pred_fallthru
          _
        // Predicated region
        $region61: #{tpu_custom_call.1} parent=47 // pred_check
          %p430 = pneg %p287
        $region62: #{tpu_custom_call.1} parent=47 // pred_check_branch
          %432 = sbr.rel (%p430) target = $region64
        $region63: #{tpu_custom_call.1} parent=47 // pred_region
          %p433 = scmp.lt.s32.totalorder %s21, 1
          %s434 = scalar_select %p433, %s21, 1
          %s435 = scalar_lea.vmem %s11, %s434
        $region64: #{tpu_custom_call.1} parent=47 // pred_fallthru
          _
      $region48: #{tpu_custom_call.1} parent=5 // pred_fallthru
        _
      %p436 = scmp.le.s32.totalorder 1, %s21
      %p437 = scmp.lt.s32.totalorder %s21, 3
      %p438 = pnand %p436, %p437
      %p439 = pneg %p438
      // Predicated region
      $region65: #{tpu_custom_call.1} parent=5 // pred_check
        _
      $region66: #{tpu_custom_call.1} parent=5 // pred_check_branch
        %441 = sbr.rel (%p438) target = $region68
      $region67: #{tpu_custom_call.1} parent=5 // pred_region
        %s442 = ssub.s32 %s21, 1
        // Predicated region
        $region69: #{tpu_custom_call.1} parent=67 // pred_check
          %p443 = pneg %p105
        $region70: #{tpu_custom_call.1} parent=67 // pred_check_branch
          %445 = sbr.rel (%p443) target = $region72
        $region71: #{tpu_custom_call.1} parent=67 // pred_region
          %447 = dma.done [#allocation6], 1024
        $region72: #{tpu_custom_call.1} parent=67 // pred_fallthru
          _
        // Predicated region
        $region73: #{tpu_custom_call.1} parent=67 // pred_check
          %p448 = pneg %p147
        $region74: #{tpu_custom_call.1} parent=67 // pred_check_branch
          %450 = sbr.rel (%p448) target = $region76
        $region75: #{tpu_custom_call.1} parent=67 // pred_region
          %452 = dma.done [#allocation9], 1024
        $region76: #{tpu_custom_call.1} parent=67 // pred_fallthru
          _
        %s453 = sand.u32 %s26, 1
        %s454 = scalar_lea.sflag [#allocation6], %s453
        %s455 = sand.u32 %s202, 1
        %s456 = smul.addr %s455, 192
        %s457 = scalar_lea.vmem [#allocation10], %s456
        // Predicated region
        $region77: #{tpu_custom_call.1} parent=67 // pred_check
          %p458 = pneg %p215
        $region78: #{tpu_custom_call.1} parent=67 // pred_check_branch
          %460 = sbr.rel (%p458) target = $region80
        $region79: #{tpu_custom_call.1} parent=67 // pred_region
          %462 = dma.done %s454, 3072
        $region80: #{tpu_custom_call.1} parent=67 // pred_fallthru
          _
        %s463 = sand.u32 %s26, 1
        %s464 = scalar_lea.sflag [#allocation6], %s463
        %s465 = sand.u32 %s228, 1
        %s466 = smul.addr %s465, 192
        %s467 = scalar_lea.vmem [#allocation11], %s466
        // Predicated region
        $region81: #{tpu_custom_call.1} parent=67 // pred_check
          %p468 = pneg %p241
        $region82: #{tpu_custom_call.1} parent=67 // pred_check_branch
          %470 = sbr.rel (%p468) target = $region84
        $region83: #{tpu_custom_call.1} parent=67 // pred_region
          %472 = dma.done %s464, 3072
        $region84: #{tpu_custom_call.1} parent=67 // pred_fallthru
          _
        %p473 = pneg %p42
        %p474 = pneg %p39
        %p475 = pneg %p63
        %p476 = pneg %p60
        %p477 = pneg %p84
        %p478 = pneg %p81
        %p479 = pneg %p105
        %p480 = pneg %p102
        %p481 = pneg %p126
        %p482 = pneg %p123
        %p483 = pneg %p147
        %p484 = pneg %p144
        %p485 = pneg %p168
        %p486 = pneg %p165
        %p487 = pneg %p189
        %p488 = pneg %p186
        %s489 = sand.u32 %s26, 1
        %s490 = scalar_lea.sflag [#allocation6], %s489
        %s491 = sand.u32 %s202, 1
        %s492 = smul.addr %s491, 192
        %s493 = scalar_lea.vmem [#allocation10], %s492
        %p494 = pneg %p215
        %p495 = pneg %p212
        %s496 = sand.u32 %s26, 1
        %s497 = scalar_lea.sflag [#allocation6], %s496
        %s498 = sand.u32 %s228, 1
        %s499 = smul.addr %s498, 192
        %s500 = scalar_lea.vmem [#allocation11], %s499
        %p501 = pneg %p241
        %p502 = pneg %p238
        %p503 = scmp.lt.s32.totalorder %s26, 1
        %s504 = scalar_select %p503, %s26, 1
        %s505 = smul.addr %s504, 3
        %s506 = scalar_lea.vmem %s10, %s505
        %p507 = pneg %p267
        %p508 = pneg %p264
        %p509 = scmp.lt.s32.totalorder %s26, 1
        %s510 = scalar_select %p509, %s26, 1
        %s511 = scalar_lea.vmem %s11, %s510
        %p512 = pneg %p293
        %p513 = pneg %p290
        %p514 = pneg %p314
        %p515 = pneg %p311
        %p516 = scmp.lt.s32.totalorder %s26, 1
        %s517 = scalar_select %p516, %s26, 1
        %s518 = smul.addr %s517, 3
        %s519 = scalar_lea.vmem %s10, %s518
        %p520 = scmp.lt.s32.totalorder %s26, 1
        %s521 = scalar_select %p520, %s26, 1
        %s522 = scalar_lea.vmem %s11, %s521
        %p524 = scmp.eq.s32.totalorder %s26, 0
        // Predicated region
        $region85: #{tpu_custom_call.1} parent=67 // pred_check
          %p525 = pneg %p524
        $region86: #{tpu_custom_call.1} parent=67 // pred_check_branch
          %527 = sbr.rel (%p525) target = $region88
        $region87: #{tpu_custom_call.1} parent=67 // pred_region
          %v528 = vld [vmem:[%s2] sm:$0xf]
          %v529 = vld [vmem:[%s2 + $0x4] sm:$0xf]
          %v530 = vld [vmem:[%s2 + $0x8] sm:$0xf]
          %v531 = vld [vmem:[%s2 + $0xc] sm:$0xf]
          %v532 = vld [vmem:[#allocation5] sm:$0xf]
          %v533 = vld [vmem:[#allocation5 + $0x4] sm:$0xf]
          %v534 = vld [vmem:[#allocation5 + $0x8] sm:$0xf]
          %v535 = vld [vmem:[#allocation5 + $0xc] sm:$0xf]
          %v536 = vld [vmem:[#allocation5 + $0x10] sm:$0xf]
          %v537 = vld [vmem:[#allocation5 + $0x14] sm:$0xf]
          %v538 = vld [vmem:[#allocation5 + $0x18] sm:$0xf]
          %v539 = vld [vmem:[#allocation5 + $0x1c] sm:$0xf]
          %v540 = vld [vmem:[#allocation5 + $0x20] sm:$0xf]
          %v541 = vld [vmem:[#allocation5 + $0x24] sm:$0xf]
          %v542 = vld [vmem:[#allocation5 + $0x28] sm:$0xf]
          %v543 = vld [vmem:[#allocation5 + $0x2c] sm:$0xf]
          %v544 = vld [vmem:[#allocation5 + $0x30] sm:$0xf]
          %v545 = vld [vmem:[#allocation5 + $0x34] sm:$0xf]
          %v546 = vld [vmem:[#allocation5 + $0x38] sm:$0xf]
          %v547 = vld [vmem:[#allocation5 + $0x3c] sm:$0xf]
          %v548 = vld [vmem:[%s4] sm:$0x1]
          %v550 = vperm.slane %v548, 0
          %v556 = vunpack.c.l.b16 %v528
          %v557 = vunpack.c.l.b16 %v529
          %v558 = vunpack.c.l.b16 %v530
          %v559 = vunpack.c.l.b16 %v531
          %v560 = vpack.c.b16 %v557, %v556
          %v561 = vpack.c.b16 %v559, %v558
          %v580 = vunpack.c.l.b16 %v532
          %v581 = vunpack.c.l.b16 %v533
          %v582 = vunpack.c.l.b16 %v534
          %v583 = vunpack.c.l.b16 %v535
          %v584 = vunpack.c.l.b16 %v536
          %v585 = vunpack.c.l.b16 %v537
          %v586 = vunpack.c.l.b16 %v538
          %v587 = vunpack.c.l.b16 %v539
          %v588 = vunpack.c.l.b16 %v540
          %v589 = vunpack.c.l.b16 %v541
          %v590 = vunpack.c.l.b16 %v542
          %v591 = vunpack.c.l.b16 %v543
          %v592 = vunpack.c.l.b16 %v544
          %v593 = vunpack.c.l.b16 %v545
          %v594 = vunpack.c.l.b16 %v546
          %v595 = vunpack.c.l.b16 %v547
          %v596 = vpack.c.b16 %v581, %v580
          %v597 = vpack.c.b16 %v583, %v582
          %v598 = vpack.c.b16 %v585, %v584
          %v599 = vpack.c.b16 %v587, %v586
          %v600 = vpack.c.b16 %v589, %v588
          %v601 = vpack.c.b16 %v591, %v590
          %v602 = vpack.c.b16 %v593, %v592
          %v603 = vpack.c.b16 %v595, %v594
          %612 = vmatpush.bf16.msra.mxu0 %v603
          %613 = vmatpush.bf16.msra.mxu0 %v602
          %614 = vmatpush.bf16.msra.mxu0 %v601
          %615 = vmatpush.bf16.msra.mxu0 %v600
          %616 = vmatpush.bf16.msra.mxu0 %v599
          %617 = vmatpush.bf16.msra.mxu0 %v598
          %618 = vmatpush.bf16.msra.mxu0 %v597
          %619 = vmatpush.bf16.msra.mxu0 %v596
          %620 = vmatmul.bf16.gmra.mxu0 %v560
          %v621 = vpop.f32.mrf.mxu0
          %v622 = vadd.f32 %v550, %v621
          %v623 = vpop.f32.mrf.mxu0
          %v624 = vadd.f32 %v550, %v623
          %625 = vmatmul.bf16.gmra.mxu0 %v561
          %v626 = vpop.f32.mrf.mxu0
          %v627 = vadd.f32 %v550, %v626
          %v628 = vpop.f32.mrf.mxu0
          %v629 = vadd.f32 %v550, %v628
          %630 = vdwg.mxu0
          %v631 = vld [vmem:[%s0] sm:$0xf]
          %v632 = vld [vmem:[%s0 + $0x4] sm:$0xf]
          %v633 = vld [vmem:[%s0 + $0x8] sm:$0xf]
          %v634 = vld [vmem:[%s0 + $0xc] sm:$0xf]
          %v635 = vpack.c.bf16 %v624, %v622
          %v636 = vpack.c.bf16 %v629, %v627
          %v641 = vunpack.c.l.b16 %v631
          %v642 = vunpack.c.l.b16 %v632
          %v643 = vunpack.c.l.b16 %v633
          %v644 = vunpack.c.l.b16 %v634
          %v645 = vpack.c.b16 %v642, %v641
          %v646 = vpack.c.b16 %v644, %v643
          %vm647 = vcmask 261120
          %v649 = vsel %vm647, %v645, 0
          %v652 = vsel %vm647, %v646, 0
          %654 = vmatpush.bf16.msra.mxu0 0
          %655 = vmatpush.bf16.msra.mxu0 0
          %656 = vmatpush.bf16.msra.mxu0 0
          %657 = vmatpush.bf16.msra.mxu0 0
          %658 = vmatpush.bf16.msra.mxu0 0
          %659 = vmatpush.bf16.msra.mxu0 0
          %660 = vmatpush.bf16.msra.mxu0 %v636
          %661 = vmatpush.bf16.msra.mxu0 %v635
          %662 = vmatmul.bf16.gmra.mxu0 %v649
          %v663 = vpop.f32.mrf.mxu0
          %v664 = vadd.f32 0.0, %v663
          %v665 = vpop.f32.mrf.mxu0
          %v666 = vadd.f32 0.0, %v665
          %667 = vmatmul.bf16.gmra.mxu0 %v652
          %v668 = vpop.f32.mrf.mxu0
          %v669 = vadd.f32 0.0, %v668
          %v670 = vpop.f32.mrf.mxu0
          %v671 = vadd.f32 0.0, %v670
          %672 = vdwg.mxu0
          %v673 = vmax.f32 %v664, 0.0
          %v674 = vmax.f32 %v666, 0.0
          %v675 = vmax.f32 %v669, 0.0
          %v676 = vmax.f32 %v671, 0.0
          %v677 = vunpack.c.l.bf16 %v528
          %v678 = vunpack.c.l.bf16 %v529
          %v679 = vunpack.c.l.bf16 %v530
          %v680 = vunpack.c.l.bf16 %v531
          %v681 = vadd.f32 %v673, %v677
          %v682 = vadd.f32 %v674, %v678
          %v683 = vadd.f32 %v675, %v679
          %v684 = vadd.f32 %v676, %v680
          %v685 = vpack.c.bf16 %v682, %v681
          %v686 = vpack.c.bf16 %v684, %v683
          %v687 = vld [vmem:[#allocation8] sm:$0xf]
          %v688 = vld [vmem:[#allocation8 + $0x4] sm:$0xf]
          %v689 = vld [vmem:[#allocation8 + $0x8] sm:$0xf]
          %v690 = vld [vmem:[#allocation8 + $0xc] sm:$0xf]
          %v691 = vld [vmem:[#allocation8 + $0x10] sm:$0xf]
          %v692 = vld [vmem:[#allocation8 + $0x14] sm:$0xf]
          %v693 = vld [vmem:[#allocation8 + $0x18] sm:$0xf]
          %v694 = vld [vmem:[#allocation8 + $0x1c] sm:$0xf]
          %v695 = vld [vmem:[#allocation8 + $0x20] sm:$0xf]
          %v696 = vld [vmem:[#allocation8 + $0x24] sm:$0xf]
          %v697 = vld [vmem:[#allocation8 + $0x28] sm:$0xf]
          %v698 = vld [vmem:[#allocation8 + $0x2c] sm:$0xf]
          %v699 = vld [vmem:[#allocation8 + $0x30] sm:$0xf]
          %v700 = vld [vmem:[#allocation8 + $0x34] sm:$0xf]
          %v701 = vld [vmem:[#allocation8 + $0x38] sm:$0xf]
          %v702 = vld [vmem:[#allocation8 + $0x3c] sm:$0xf]
          %v703 = vld [vmem:[%s6] sm:$0x1]
          %v705 = vperm.slane %v703, 0
          %v723 = vunpack.c.l.b16 %v687
          %v724 = vunpack.c.l.b16 %v688
          %v725 = vunpack.c.l.b16 %v689
          %v726 = vunpack.c.l.b16 %v690
          %v727 = vunpack.c.l.b16 %v691
          %v728 = vunpack.c.l.b16 %v692
          %v729 = vunpack.c.l.b16 %v693
          %v730 = vunpack.c.l.b16 %v694
          %v731 = vunpack.c.l.b16 %v695
          %v732 = vunpack.c.l.b16 %v696
          %v733 = vunpack.c.l.b16 %v697
          %v734 = vunpack.c.l.b16 %v698
          %v735 = vunpack.c.l.b16 %v699
          %v736 = vunpack.c.l.b16 %v700
          %v737 = vunpack.c.l.b16 %v701
          %v738 = vunpack.c.l.b16 %v702
          %v739 = vpack.c.b16 %v724, %v723
          %v740 = vpack.c.b16 %v726, %v725
          %v741 = vpack.c.b16 %v728, %v727
          %v742 = vpack.c.b16 %v730, %v729
          %v743 = vpack.c.b16 %v732, %v731
          %v744 = vpack.c.b16 %v734, %v733
          %v745 = vpack.c.b16 %v736, %v735
          %v746 = vpack.c.b16 %v738, %v737
          %755 = vmatpush.bf16.msra.mxu0 %v746
          %756 = vmatpush.bf16.msra.mxu0 %v745
          %757 = vmatpush.bf16.msra.mxu0 %v744
          %758 = vmatpush.bf16.msra.mxu0 %v743
          %759 = vmatpush.bf16.msra.mxu0 %v742
          %760 = vmatpush.bf16.msra.mxu0 %v741
          %761 = vmatpush.bf16.msra.mxu0 %v740
          %762 = vmatpush.bf16.msra.mxu0 %v739
          %763 = vmatmul.bf16.gmra.mxu0 %v685
          %v764 = vpop.f32.mrf.mxu0
          %v765 = vadd.f32 %v705, %v764
          %v766 = vpop.f32.mrf.mxu0
          %v767 = vadd.f32 %v705, %v766
          %768 = vmatmul.bf16.gmra.mxu0 %v686
          %v769 = vpop.f32.mrf.mxu0
          %v770 = vadd.f32 %v705, %v769
          %v771 = vpop.f32.mrf.mxu0
          %v772 = vadd.f32 %v705, %v771
          %773 = vdwg.mxu0
          %v774 = vld [vmem:[%s1] sm:$0xf]
          %v775 = vld [vmem:[%s1 + $0x4] sm:$0xf]
          %v776 = vld [vmem:[%s1 + $0x8] sm:$0xf]
          %v777 = vld [vmem:[%s1 + $0xc] sm:$0xf]
          %v778 = vld [vmem:[%s1 + $0x10] sm:$0xf]
          %v779 = vld [vmem:[%s1 + $0x14] sm:$0xf]
          %v780 = vld [vmem:[%s1 + $0x18] sm:$0xf]
          %v781 = vld [vmem:[%s1 + $0x1c] sm:$0xf]
          %v782 = vpack.c.bf16 %v767, %v765
          %v783 = vpack.c.bf16 %v772, %v770
          %v792 = vunpack.c.l.b16 %v774
          %v793 = vunpack.c.l.b16 %v775
          %v794 = vunpack.c.l.b16 %v776
          %v795 = vunpack.c.l.b16 %v777
          %v796 = vunpack.c.l.b16 %v778
          %v797 = vunpack.c.l.b16 %v779
          %v798 = vunpack.c.l.b16 %v780
          %v799 = vunpack.c.l.b16 %v781
          %v800 = vpack.c.b16 %v793, %v792
          %v801 = vpack.c.b16 %v795, %v794
          %v802 = vpack.c.b16 %v797, %v796
          %v803 = vpack.c.b16 %v799, %v798
          %v805 = vsel %vm647, %v800, 0
          %v808 = vsel %vm647, %v801, 0
          %v811 = vsel %vm647, %v802, 0
          %v814 = vsel %vm647, %v803, 0
          %816 = vmatpush.bf16.msra.mxu0 0
          %817 = vmatpush.bf16.msra.mxu0 0
          %818 = vmatpush.bf16.msra.mxu0 0
          %819 = vmatpush.bf16.msra.mxu0 0
          %820 = vmatpush.bf16.msra.mxu0 0
          %821 = vmatpush.bf16.msra.mxu0 0
          %822 = vmatpush.bf16.msra.mxu0 %v783
          %823 = vmatpush.bf16.msra.mxu0 %v782
          %824 = vmatmul.bf16.gmra.mxu0 %v805
          %v825 = vpop.f32.mrf.mxu0
          %v826 = vadd.f32 0.0, %v825
          %v827 = vpop.f32.mrf.mxu0
          %v828 = vadd.f32 0.0, %v827
          %829 = vmatmul.bf16.gmra.mxu0 %v808
          %v830 = vpop.f32.mrf.mxu0
          %v831 = vadd.f32 0.0, %v830
          %v832 = vpop.f32.mrf.mxu0
          %v833 = vadd.f32 0.0, %v832
          %834 = vmatmul.bf16.gmra.mxu0 %v811
          %v835 = vpop.f32.mrf.mxu0
          %v836 = vadd.f32 0.0, %v835
          %v837 = vpop.f32.mrf.mxu0
          %v838 = vadd.f32 0.0, %v837
          %839 = vmatmul.bf16.gmra.mxu0 %v814
          %v840 = vpop.f32.mrf.mxu0
          %v841 = vadd.f32 0.0, %v840
          %v842 = vpop.f32.mrf.mxu0
          %v843 = vadd.f32 0.0, %v842
          %844 = vdwg.mxu0
          %845 = vst [vmem:[#allocation2] sm:$0xff] %v826
          %846 = vst [vmem:[#allocation2 + $0x8] sm:$0xff] %v828
          %847 = vst [vmem:[#allocation2 + $0x10] sm:$0xff] %v831
          %848 = vst [vmem:[#allocation2 + $0x18] sm:$0xff] %v833
          %849 = vst [vmem:[#allocation2 + $0x20] sm:$0xff] %v836
          %850 = vst [vmem:[#allocation2 + $0x28] sm:$0xff] %v838
          %851 = vst [vmem:[#allocation2 + $0x30] sm:$0xff] %v841
          %852 = vst [vmem:[#allocation2 + $0x38] sm:$0xff] %v843
          %853 = vst [vmem:[#allocation3] sm:$0xff] %v826
          %854 = vst [vmem:[#allocation3 + $0x8] sm:$0xff] %v828
          %855 = vst [vmem:[#allocation3 + $0x10] sm:$0xff] %v831
          %856 = vst [vmem:[#allocation3 + $0x18] sm:$0xff] %v833
          %857 = vst [vmem:[#allocation3 + $0x20] sm:$0xff] %v836
          %858 = vst [vmem:[#allocation3 + $0x28] sm:$0xff] %v838
          %859 = vst [vmem:[#allocation3 + $0x30] sm:$0xff] %v841
          %860 = vst [vmem:[#allocation3 + $0x38] sm:$0xff] %v843
        $region88: #{tpu_custom_call.1} parent=67 // pred_fallthru
          _
        %v861 = vld [vmem:[%s457] sm:$0xff]
        %v862 = vld [vmem:[%s457 + $0x8] sm:$0xf]
        %v863 = vld [vmem:[%s457 + $0xc] sm:$0xff]
        %v864 = vld [vmem:[%s457 + $0x14] sm:$0xf]
        %v865 = vld [vmem:[%s457 + $0x18] sm:$0xff]
        %v866 = vld [vmem:[%s457 + $0x20] sm:$0xf]
        %v867 = vld [vmem:[%s457 + $0x24] sm:$0xff]
        %v868 = vld [vmem:[%s457 + $0x2c] sm:$0xf]
        %v869 = vld [vmem:[%s457 + $0x30] sm:$0xff]
        %v870 = vld [vmem:[%s457 + $0x38] sm:$0xf]
        %v871 = vld [vmem:[%s457 + $0x3c] sm:$0xff]
        %v872 = vld [vmem:[%s457 + $0x44] sm:$0xf]
        %v873 = vld [vmem:[%s457 + $0x48] sm:$0xff]
        %v874 = vld [vmem:[%s457 + $0x50] sm:$0xf]
        %v875 = vld [vmem:[%s457 + $0x54] sm:$0xff]
        %v876 = vld [vmem:[%s457 + $0x5c] sm:$0xf]
        %v877 = vld [vmem:[%s457 + $0x60] sm:$0xff]
        %v878 = vld [vmem:[%s457 + $0x68] sm:$0xf]
        %v879 = vld [vmem:[%s457 + $0x6c] sm:$0xff]
        %v880 = vld [vmem:[%s457 + $0x74] sm:$0xf]
        %v881 = vld [vmem:[%s457 + $0x78] sm:$0xff]
        %v882 = vld [vmem:[%s457 + $0x80] sm:$0xf]
        %v883 = vld [vmem:[%s457 + $0x84] sm:$0xff]
        %v884 = vld [vmem:[%s457 + $0x8c] sm:$0xf]
        %v885 = vld [vmem:[%s457 + $0x90] sm:$0xff]
        %v886 = vld [vmem:[%s457 + $0x98] sm:$0xf]
        %v887 = vld [vmem:[%s457 + $0x9c] sm:$0xff]
        %v888 = vld [vmem:[%s457 + $0xa4] sm:$0xf]
        %v889 = vld [vmem:[%s457 + $0xa8] sm:$0xff]
        %v890 = vld [vmem:[%s457 + $0xb0] sm:$0xf]
        %v891 = vld [vmem:[%s457 + $0xb4] sm:$0xff]
        %v892 = vld [vmem:[%s457 + $0xbc] sm:$0xf]
        %v893 = vld [vmem:[%s467] sm:$0xff]
        %v894 = vld [vmem:[%s467 + $0x8] sm:$0xf]
        %v895 = vld [vmem:[%s467 + $0xc] sm:$0xff]
        %v896 = vld [vmem:[%s467 + $0x14] sm:$0xf]
        %v897 = vld [vmem:[%s467 + $0x18] sm:$0xff]
        %v898 = vld [vmem:[%s467 + $0x20] sm:$0xf]
        %v899 = vld [vmem:[%s467 + $0x24] sm:$0xff]
        %v900 = vld [vmem:[%s467 + $0x2c] sm:$0xf]
        %v901 = vld [vmem:[%s467 + $0x30] sm:$0xff]
        %v902 = vld [vmem:[%s467 + $0x38] sm:$0xf]
        %v903 = vld [vmem:[%s467 + $0x3c] sm:$0xff]
        %v904 = vld [vmem:[%s467 + $0x44] sm:$0xf]
        %v905 = vld [vmem:[%s467 + $0x48] sm:$0xff]
        %v906 = vld [vmem:[%s467 + $0x50] sm:$0xf]
        %v907 = vld [vmem:[%s467 + $0x54] sm:$0xff]
        %v908 = vld [vmem:[%s467 + $0x5c] sm:$0xf]
        %v909 = vld [vmem:[%s467 + $0x60] sm:$0xff]
        %v910 = vld [vmem:[%s467 + $0x68] sm:$0xf]
        %v911 = vld [vmem:[%s467 + $0x6c] sm:$0xff]
        %v912 = vld [vmem:[%s467 + $0x74] sm:$0xf]
        %v913 = vld [vmem:[%s467 + $0x78] sm:$0xff]
        %v914 = vld [vmem:[%s467 + $0x80] sm:$0xf]
        %v915 = vld [vmem:[%s467 + $0x84] sm:$0xff]
        %v916 = vld [vmem:[%s467 + $0x8c] sm:$0xf]
        %v917 = vld [vmem:[%s467 + $0x90] sm:$0xff]
        %v918 = vld [vmem:[%s467 + $0x98] sm:$0xf]
        %v919 = vld [vmem:[%s467 + $0x9c] sm:$0xff]
        %v920 = vld [vmem:[%s467 + $0xa4] sm:$0xf]
        %v921 = vld [vmem:[%s467 + $0xa8] sm:$0xff]
        %v922 = vld [vmem:[%s467 + $0xb0] sm:$0xf]
        %v923 = vld [vmem:[%s467 + $0xb4] sm:$0xff]
        %v924 = vld [vmem:[%s467 + $0xbc] sm:$0xf]
        %v925 = vld [vmem:[%s519] sm:$0x7]
        %v926 = vld [vmem:[%s522] sm:$0x1]
        %v927 = vld [vmem:[#allocation3] sm:$0xff]
        %v928 = vld [vmem:[#allocation3 + $0x8] sm:$0xff]
        %v929 = vld [vmem:[#allocation3 + $0x10] sm:$0xff]
        %v930 = vld [vmem:[#allocation3 + $0x18] sm:$0xff]
        %v931 = vld [vmem:[#allocation3 + $0x20] sm:$0xff]
        %v932 = vld [vmem:[#allocation3 + $0x28] sm:$0xff]
        %v933 = vld [vmem:[#allocation3 + $0x30] sm:$0xff]
        %v934 = vld [vmem:[#allocation3 + $0x38] sm:$0xff]
        %v935 = vpack.c.bf16 %v928, %v927
        %v936 = vpack.c.bf16 %v930, %v929
        %v937 = vpack.c.bf16 %v932, %v931
        %v938 = vpack.c.bf16 %v934, %v933
        %v940 = vperm.slane %v925, 0
        %v941 = vperm.slane %v925, 1
        %v942 = vperm.slane %v925, 2
        %v978 = vunpack.c.l.b16 %v861
        %v979 = vunpack.c.h.b16 %v861
        %v980 = vunpack.c.l.b16 %v862
        %v981 = vunpack.c.l.b16 %v863
        %v982 = vunpack.c.h.b16 %v863
        %v983 = vunpack.c.l.b16 %v864
        %v984 = vunpack.c.l.b16 %v865
        %v985 = vunpack.c.h.b16 %v865
        %v986 = vunpack.c.l.b16 %v866
        %v987 = vunpack.c.l.b16 %v867
        %v988 = vunpack.c.h.b16 %v867
        %v989 = vunpack.c.l.b16 %v868
        %v990 = vunpack.c.l.b16 %v869
        %v991 = vunpack.c.h.b16 %v869
        %v992 = vunpack.c.l.b16 %v870
        %v993 = vunpack.c.l.b16 %v871
        %v994 = vunpack.c.h.b16 %v871
        %v995 = vunpack.c.l.b16 %v872
        %v996 = vunpack.c.l.b16 %v873
        %v997 = vunpack.c.h.b16 %v873
        %v998 = vunpack.c.l.b16 %v874
        %v999 = vunpack.c.l.b16 %v875
        %v1000 = vunpack.c.h.b16 %v875
        %v1001 = vunpack.c.l.b16 %v876
        %v1002 = vunpack.c.l.b16 %v877
        %v1003 = vunpack.c.h.b16 %v877
        %v1004 = vunpack.c.l.b16 %v878
        %v1005 = vunpack.c.l.b16 %v879
        %v1006 = vunpack.c.h.b16 %v879
        %v1007 = vunpack.c.l.b16 %v880
        %v1008 = vunpack.c.l.b16 %v881
        %v1009 = vunpack.c.h.b16 %v881
        %v1010 = vunpack.c.l.b16 %v882
        %v1011 = vunpack.c.l.b16 %v883
        %v1012 = vunpack.c.h.b16 %v883
        %v1013 = vunpack.c.l.b16 %v884
        %v1014 = vunpack.c.l.b16 %v885
        %v1015 = vunpack.c.h.b16 %v885
        %v1016 = vunpack.c.l.b16 %v886
        %v1017 = vunpack.c.l.b16 %v887
        %v1018 = vunpack.c.h.b16 %v887
        %v1019 = vunpack.c.l.b16 %v888
        %v1020 = vunpack.c.l.b16 %v889
        %v1021 = vunpack.c.h.b16 %v889
        %v1022 = vunpack.c.l.b16 %v890
        %v1023 = vunpack.c.l.b16 %v891
        %v1024 = vunpack.c.h.b16 %v891
        %v1025 = vunpack.c.l.b16 %v892
        %v1026 = vpack.c.b16 %v981, %v978
        %v1027 = vpack.c.b16 %v982, %v979
        %v1028 = vpack.c.b16 %v983, %v980
        %v1029 = vpack.c.b16 %v987, %v984
        %v1030 = vpack.c.b16 %v988, %v985
        %v1031 = vpack.c.b16 %v989, %v986
        %v1032 = vpack.c.b16 %v993, %v990
        %v1033 = vpack.c.b16 %v994, %v991
        %v1034 = vpack.c.b16 %v995, %v992
        %v1035 = vpack.c.b16 %v999, %v996
        %v1036 = vpack.c.b16 %v1000, %v997
        %v1037 = vpack.c.b16 %v1001, %v998
        %v1038 = vpack.c.b16 %v1005, %v1002
        %v1039 = vpack.c.b16 %v1006, %v1003
        %v1040 = vpack.c.b16 %v1007, %v1004
        %v1041 = vpack.c.b16 %v1011, %v1008
        %v1042 = vpack.c.b16 %v1012, %v1009
        %v1043 = vpack.c.b16 %v1013, %v1010
        %v1044 = vpack.c.b16 %v1017, %v1014
        %v1045 = vpack.c.b16 %v1018, %v1015
        %v1046 = vpack.c.b16 %v1019, %v1016
        %v1047 = vpack.c.b16 %v1023, %v1020
        %v1048 = vpack.c.b16 %v1024, %v1021
        %v1049 = vpack.c.b16 %v1025, %v1022
        %1074 = vmatpush.bf16.msra.mxu0 %v1047
        %1075 = vmatpush.bf16.msra.mxu0 %v1044
        %1076 = vmatpush.bf16.msra.mxu0 %v1041
        %1077 = vmatpush.bf16.msra.mxu0 %v1038
        %1078 = vmatpush.bf16.msra.mxu0 %v1035
        %1079 = vmatpush.bf16.msra.mxu0 %v1032
        %1080 = vmatpush.bf16.msra.mxu0 %v1029
        %1081 = vmatpush.bf16.msra.mxu0 %v1026
        %1082 = vmatmul.bf16.gmra.mxu0 %v935
        %v1083 = vpop.f32.mrf.mxu0
        %v1084 = vadd.f32 %v940, %v1083
        %v1085 = vpop.f32.mrf.mxu0
        %v1086 = vadd.f32 %v940, %v1085
        %1087 = vmatmul.bf16.gmra.mxu0 %v936
        %v1088 = vpop.f32.mrf.mxu0
        %v1089 = vadd.f32 %v940, %v1088
        %v1090 = vpop.f32.mrf.mxu0
        %v1091 = vadd.f32 %v940, %v1090
        %1092 = vmatmul.bf16.gmra.mxu0 %v937
        %v1093 = vpop.f32.mrf.mxu0
        %v1094 = vadd.f32 %v940, %v1093
        %v1095 = vpop.f32.mrf.mxu0
        %v1096 = vadd.f32 %v940, %v1095
        %1097 = vmatmul.bf16.gmra.mxu0 %v938
        %v1098 = vpop.f32.mrf.mxu0
        %v1099 = vadd.f32 %v940, %v1098
        %v1100 = vpop.f32.mrf.mxu0
        %v1101 = vadd.f32 %v940, %v1100
        %1102 = vdwg.mxu0
        %1103 = vmatpush.bf16.msra.mxu0 %v1048
        %1104 = vmatpush.bf16.msra.mxu0 %v1045
        %1105 = vmatpush.bf16.msra.mxu0 %v1042
        %1106 = vmatpush.bf16.msra.mxu0 %v1039
        %1107 = vmatpush.bf16.msra.mxu0 %v1036
        %1108 = vmatpush.bf16.msra.mxu0 %v1033
        %1109 = vmatpush.bf16.msra.mxu0 %v1030
        %1110 = vmatpush.bf16.msra.mxu0 %v1027
        %1111 = vmatmul.bf16.gmra.mxu0 %v935
        %v1112 = vpop.f32.mrf.mxu0
        %v1113 = vadd.f32 %v941, %v1112
        %v1114 = vpop.f32.mrf.mxu0
        %v1115 = vadd.f32 %v941, %v1114
        %1116 = vmatmul.bf16.gmra.mxu0 %v936
        %v1117 = vpop.f32.mrf.mxu0
        %v1118 = vadd.f32 %v941, %v1117
        %v1119 = vpop.f32.mrf.mxu0
        %v1120 = vadd.f32 %v941, %v1119
        %1121 = vmatmul.bf16.gmra.mxu0 %v937
        %v1122 = vpop.f32.mrf.mxu0
        %v1123 = vadd.f32 %v941, %v1122
        %v1124 = vpop.f32.mrf.mxu0
        %v1125 = vadd.f32 %v941, %v1124
        %1126 = vmatmul.bf16.gmra.mxu0 %v938
        %v1127 = vpop.f32.mrf.mxu0
        %v1128 = vadd.f32 %v941, %v1127
        %v1129 = vpop.f32.mrf.mxu0
        %v1130 = vadd.f32 %v941, %v1129
        %1131 = vdwg.mxu0
        %1132 = vmatpush.bf16.msra.mxu0 %v1049
        %1133 = vmatpush.bf16.msra.mxu0 %v1046
        %1134 = vmatpush.bf16.msra.mxu0 %v1043
        %1135 = vmatpush.bf16.msra.mxu0 %v1040
        %1136 = vmatpush.bf16.msra.mxu0 %v1037
        %1137 = vmatpush.bf16.msra.mxu0 %v1034
        %1138 = vmatpush.bf16.msra.mxu0 %v1031
        %1139 = vmatpush.bf16.msra.mxu0 %v1028
        %1140 = vmatmul.bf16.gmra.mxu0 %v935
        %v1141 = vpop.f32.mrf.mxu0
        %v1142 = vadd.f32 %v942, %v1141
        %v1143 = vpop.f32.mrf.mxu0
        %v1144 = vadd.f32 %v942, %v1143
        %1145 = vmatmul.bf16.gmra.mxu0 %v936
        %v1146 = vpop.f32.mrf.mxu0
        %v1147 = vadd.f32 %v942, %v1146
        %v1148 = vpop.f32.mrf.mxu0
        %v1149 = vadd.f32 %v942, %v1148
        %1150 = vmatmul.bf16.gmra.mxu0 %v937
        %v1151 = vpop.f32.mrf.mxu0
        %v1152 = vadd.f32 %v942, %v1151
        %v1153 = vpop.f32.mrf.mxu0
        %v1154 = vadd.f32 %v942, %v1153
        %1155 = vmatmul.bf16.gmra.mxu0 %v938
        %v1156 = vpop.f32.mrf.mxu0
        %v1157 = vadd.f32 %v942, %v1156
        %v1158 = vpop.f32.mrf.mxu0
        %v1159 = vadd.f32 %v942, %v1158
        %1160 = vdwg.mxu0
        %1161 = vst [vmem:[#allocation4] sm:$0xff] %v1084
        %1162 = vst [vmem:[#allocation4 + $0x8] sm:$0xff] %v1113
        %1163 = vst [vmem:[#allocation4 + $0x10] sm:$0xff] %v1142
        %1164 = vst [vmem:[#allocation4 + $0x18] sm:$0xff] %v1086
        %1165 = vst [vmem:[#allocation4 + $0x20] sm:$0xff] %v1115
        %1166 = vst [vmem:[#allocation4 + $0x28] sm:$0xff] %v1144
        %1167 = vst [vmem:[#allocation4 + $0x30] sm:$0xff] %v1089
        %1168 = vst [vmem:[#allocation4 + $0x38] sm:$0xff] %v1118
        %1169 = vst [vmem:[#allocation4 + $0x40] sm:$0xff] %v1147
        %1170 = vst [vmem:[#allocation4 + $0x48] sm:$0xff] %v1091
        %1171 = vst [vmem:[#allocation4 + $0x50] sm:$0xff] %v1120
        %1172 = vst [vmem:[#allocation4 + $0x58] sm:$0xff] %v1149
        %1173 = vst [vmem:[#allocation4 + $0x60] sm:$0xff] %v1094
        %1174 = vst [vmem:[#allocation4 + $0x68] sm:$0xff] %v1123
        %1175 = vst [vmem:[#allocation4 + $0x70] sm:$0xff] %v1152
        %1176 = vst [vmem:[#allocation4 + $0x78] sm:$0xff] %v1096
        %1177 = vst [vmem:[#allocation4 + $0x80] sm:$0xff] %v1125
        %1178 = vst [vmem:[#allocation4 + $0x88] sm:$0xff] %v1154
        %1179 = vst [vmem:[#allocation4 + $0x90] sm:$0xff] %v1099
        %1180 = vst [vmem:[#allocation4 + $0x98] sm:$0xff] %v1128
        %1181 = vst [vmem:[#allocation4 + $0xa0] sm:$0xff] %v1157
        %1182 = vst [vmem:[#allocation4 + $0xa8] sm:$0xff] %v1101
        %1183 = vst [vmem:[#allocation4 + $0xb0] sm:$0xff] %v1130
        %1184 = vst [vmem:[#allocation4 + $0xb8] sm:$0xff] %v1159
        %v1185 = vld [vmem:[%s7] sm:$0xff]
        %v1186 = vld [vmem:[#allocation4] sm:$0xff]
        %v1187 = vld [vmem:[#allocation4 + $0x8] sm:$0xff]
        %v1188 = vld [vmem:[#allocation4 + $0x10] sm:$0xff]
        %v1221 = vunpack.c.l.b16 %v893
        %v1222 = vunpack.c.h.b16 %v893
        %v1223 = vunpack.c.l.b16 %v894
        %v1224 = vunpack.c.l.b16 %v895
        %v1225 = vunpack.c.h.b16 %v895
        %v1226 = vunpack.c.l.b16 %v896
        %v1227 = vunpack.c.l.b16 %v897
        %v1228 = vunpack.c.h.b16 %v897
        %v1229 = vunpack.c.l.b16 %v898
        %v1230 = vunpack.c.l.b16 %v899
        %v1231 = vunpack.c.h.b16 %v899
        %v1232 = vunpack.c.l.b16 %v900
        %v1233 = vunpack.c.l.b16 %v901
        %v1234 = vunpack.c.h.b16 %v901
        %v1235 = vunpack.c.l.b16 %v902
        %v1236 = vunpack.c.l.b16 %v903
        %v1237 = vunpack.c.h.b16 %v903
        %v1238 = vunpack.c.l.b16 %v904
        %v1239 = vunpack.c.l.b16 %v905
        %v1240 = vunpack.c.h.b16 %v905
        %v1241 = vunpack.c.l.b16 %v906
        %v1242 = vunpack.c.l.b16 %v907
        %v1243 = vunpack.c.h.b16 %v907
        %v1244 = vunpack.c.l.b16 %v908
        %v1245 = vunpack.c.l.b16 %v909
        %v1246 = vunpack.c.h.b16 %v909
        %v1247 = vunpack.c.l.b16 %v910
        %v1248 = vunpack.c.l.b16 %v911
        %v1249 = vunpack.c.h.b16 %v911
        %v1250 = vunpack.c.l.b16 %v912
        %v1251 = vunpack.c.l.b16 %v913
        %v1252 = vunpack.c.h.b16 %v913
        %v1253 = vunpack.c.l.b16 %v914
        %v1254 = vunpack.c.l.b16 %v915
        %v1255 = vunpack.c.h.b16 %v915
        %v1256 = vunpack.c.l.b16 %v916
        %v1257 = vunpack.c.l.b16 %v917
        %v1258 = vunpack.c.h.b16 %v917
        %v1259 = vunpack.c.l.b16 %v918
        %v1260 = vunpack.c.l.b16 %v919
        %v1261 = vunpack.c.h.b16 %v919
        %v1262 = vunpack.c.l.b16 %v920
        %v1263 = vunpack.c.l.b16 %v921
        %v1264 = vunpack.c.h.b16 %v921
        %v1265 = vunpack.c.l.b16 %v922
        %v1266 = vunpack.c.l.b16 %v923
        %v1267 = vunpack.c.h.b16 %v923
        %v1268 = vunpack.c.l.b16 %v924
        %v1269 = vpack.c.b16 %v1224, %v1221
        %v1270 = vpack.c.b16 %v1225, %v1222
        %v1271 = vpack.c.b16 %v1226, %v1223
        %v1272 = vpack.c.b16 %v1230, %v1227
        %v1273 = vpack.c.b16 %v1231, %v1228
        %v1274 = vpack.c.b16 %v1232, %v1229
        %v1275 = vpack.c.b16 %v1236, %v1233
        %v1276 = vpack.c.b16 %v1237, %v1234
        %v1277 = vpack.c.b16 %v1238, %v1235
        %v1278 = vpack.c.b16 %v1242, %v1239
        %v1279 = vpack.c.b16 %v1243, %v1240
        %v1280 = vpack.c.b16 %v1244, %v1241
        %v1281 = vpack.c.b16 %v1248, %v1245
        %v1282 = vpack.c.b16 %v1249, %v1246
        %v1283 = vpack.c.b16 %v1250, %v1247
        %v1284 = vpack.c.b16 %v1254, %v1251
        %v1285 = vpack.c.b16 %v1255, %v1252
        %v1286 = vpack.c.b16 %v1256, %v1253
        %v1287 = vpack.c.b16 %v1260, %v1257
        %v1288 = vpack.c.b16 %v1261, %v1258
        %v1289 = vpack.c.b16 %v1262, %v1259
        %v1290 = vpack.c.b16 %v1266, %v1263
        %v1291 = vpack.c.b16 %v1267, %v1264
        %v1292 = vpack.c.b16 %v1268, %v1265
        %1317 = vmatpush.bf16.msra.mxu0 %v1290
        %1318 = vmatpush.bf16.msra.mxu0 %v1287
        %1319 = vmatpush.bf16.msra.mxu0 %v1284
        %1320 = vmatpush.bf16.msra.mxu0 %v1281
        %1321 = vmatpush.bf16.msra.mxu0 %v1278
        %1322 = vmatpush.bf16.msra.mxu0 %v1275
        %1323 = vmatpush.bf16.msra.mxu0 %v1272
        %1324 = vmatpush.bf16.msra.mxu0 %v1269
        %1325 = vmatmul.bf16.gmra.mxu0 0
        %v1326 = vpop.f32.mrf.mxu0
        %v1327 = vadd.f32 0.0, %v1326
        %v1328 = vpop.f32.mrf.mxu0
        %1329 = vdwg.mxu0
        %1330 = vmatpush.bf16.msra.mxu0 %v1291
        %1331 = vmatpush.bf16.msra.mxu0 %v1288
        %1332 = vmatpush.bf16.msra.mxu0 %v1285
        %1333 = vmatpush.bf16.msra.mxu0 %v1282
        %1334 = vmatpush.bf16.msra.mxu0 %v1279
        %1335 = vmatpush.bf16.msra.mxu0 %v1276
        %1336 = vmatpush.bf16.msra.mxu0 %v1273
        %1337 = vmatpush.bf16.msra.mxu0 %v1270
        %1338 = vmatmul.bf16.gmra.mxu0 0
        %v1339 = vpop.f32.mrf.mxu0
        %v1340 = vadd.f32 0.0, %v1339
        %v1341 = vpop.f32.mrf.mxu0
        %1342 = vdwg.mxu0
        %1343 = vmatpush.bf16.msra.mxu0 %v1292
        %1344 = vmatpush.bf16.msra.mxu0 %v1289
        %1345 = vmatpush.bf16.msra.mxu0 %v1286
        %1346 = vmatpush.bf16.msra.mxu0 %v1283
        %1347 = vmatpush.bf16.msra.mxu0 %v1280
        %1348 = vmatpush.bf16.msra.mxu0 %v1277
        %1349 = vmatpush.bf16.msra.mxu0 %v1274
        %1350 = vmatpush.bf16.msra.mxu0 %v1271
        %1351 = vmatmul.bf16.gmra.mxu0 0
        %v1352 = vpop.f32.mrf.mxu0
        %v1353 = vadd.f32 0.0, %v1352
        %v1354 = vpop.f32.mrf.mxu0
        %1355 = vdwg.mxu0
        %v1356 = vadd.f32 %v1186, %v1327
        %v1357 = vxor.u32 %v1356, 2147483648
        %v1358 = vmul.f32 %v1357, 1.442695
        %v1359 = vpow.pop %v1358
        %v1360 = vadd.f32 %v1359, 1.0
        %v1361 = vrcp.pop %v1360
        %v1362 = vmul.f32 %v1360, %v1361
        %v1363 = vsub.f32 1.0, %v1362
        %v1364 = vmul.f32 %v1361, %v1363
        %v1365 = vadd.f32 %v1361, %v1364
        %vm1366 = vweird.f32 %v1360
        %vm1367 = vweird.f32 %v1361
        %vm1368 = vmor %vm1366, %vm1367
        %v1369 = vsel %vm1368, %v1361, %v1365
        %v1370 = vand.u32 2147483647, %v1360
        %vm1371 = vcmp.eq.f32.partialorder %v1370, 8.507059e+37
        %v1372 = vand.u32 %v1360, 2147483648
        %v1373 = vor.u32 1.1754944e-38, %v1372
        %v1374 = vsel %vm1371, %v1373, %v1369
        %v1375 = vmul.f32 1.0, %v1374
        %v1376 = vadd.f32 %v1187, %v1340
        %v1377 = vxor.u32 %v1376, 2147483648
        %v1378 = vmul.f32 %v1377, 1.442695
        %v1379 = vpow.pop %v1378
        %v1380 = vadd.f32 %v1379, 1.0
        %v1381 = vrcp.pop %v1380
        %v1382 = vmul.f32 %v1380, %v1381
        %v1383 = vsub.f32 1.0, %v1382
        %v1384 = vmul.f32 %v1381, %v1383
        %v1385 = vadd.f32 %v1381, %v1384
        %vm1386 = vweird.f32 %v1380
        %vm1387 = vweird.f32 %v1381
        %vm1388 = vmor %vm1386, %vm1387
        %v1389 = vsel %vm1388, %v1381, %v1385
        %v1390 = vand.u32 2147483647, %v1380
        %vm1391 = vcmp.eq.f32.partialorder %v1390, 8.507059e+37
        %v1392 = vand.u32 %v1380, 2147483648
        %v1393 = vor.u32 1.1754944e-38, %v1392
        %v1394 = vsel %vm1391, %v1393, %v1389
        %v1395 = vmul.f32 1.0, %v1394
        %v1397 = vperm.slane %v926, 0
        %v1399 = vadd.f32 %v1353, %v1397
        %v1400 = vmul.f32 %v1375, %v1399
        %v1401 = vadd.f32 %v1188, %v1400
        %v1402 = vtanh.pop %v1401
        %v1403 = vsub.f32 1.0, %v1395
        %v1404 = vmul.f32 %v1403, %v1402
        %v1405 = vmul.f32 %v1395, 0.0
        %v1406 = vadd.f32 %v1404, %v1405
        %vm1407 = vcmp.eq.s32.totalorder %v1185, 1
        %v1408 = vsel %vm1407, 1, 0
        %1409 = vset.pattern.permute.xlu0 0
        %1410 = vperm.xlu0 %1409, %v1408
        %v1411 = vpop.permute.xlu0 %1410
        %vm1412 = vcmp.eq.s32.totalorder %v1411, 1
        %v1413 = vsel %vm1412, %v1406, 0.0
        %v1414 = vld [vmem:[#allocation2] sm:$0xff]
        %v1415 = vmax.f32 %v1406, 0.0
        %v1416 = vadd.f32 %v1414, %v1415
        %1417 = vst [vmem:[#allocation3] sm:$0xff] %v1416
        %v1418 = vld [vmem:[#allocation4 + $0x18] sm:$0xff]
        %v1419 = vld [vmem:[#allocation4 + $0x20] sm:$0xff]
        %v1420 = vld [vmem:[#allocation4 + $0x28] sm:$0xff]
        %v1421 = vpack.c.bf16 %v1406, %v1406
        %1422 = vmatpush.bf16.msra.mxu0 %v1290
        %1423 = vmatpush.bf16.msra.mxu0 %v1287
        %1424 = vmatpush.bf16.msra.mxu0 %v1284
        %1425 = vmatpush.bf16.msra.mxu0 %v1281
        %1426 = vmatpush.bf16.msra.mxu0 %v1278
        %1427 = vmatpush.bf16.msra.mxu0 %v1275
        %1428 = vmatpush.bf16.msra.mxu0 %v1272
        %1429 = vmatpush.bf16.msra.mxu0 %v1269
        %1430 = vmatmul.bf16.gmra.mxu0 %v1421
        %v1431 = vpop.f32.mrf.mxu0
        %v1432 = vadd.f32 0.0, %v1431
        %v1433 = vpop.f32.mrf.mxu0
        %1434 = vdwg.mxu0
        %1435 = vmatpush.bf16.msra.mxu0 %v1291
        %1436 = vmatpush.bf16.msra.mxu0 %v1288
        %1437 = vmatpush.bf16.msra.mxu0 %v1285
        %1438 = vmatpush.bf16.msra.mxu0 %v1282
        %1439 = vmatpush.bf16.msra.mxu0 %v1279
        %1440 = vmatpush.bf16.msra.mxu0 %v1276
        %1441 = vmatpush.bf16.msra.mxu0 %v1273
        %1442 = vmatpush.bf16.msra.mxu0 %v1270
        %1443 = vmatmul.bf16.gmra.mxu0 %v1421
        %v1444 = vpop.f32.mrf.mxu0
        %v1445 = vadd.f32 0.0, %v1444
        %v1446 = vpop.f32.mrf.mxu0
        %1447 = vdwg.mxu0
        %1448 = vmatpush.bf16.msra.mxu0 %v1292
        %1449 = vmatpush.bf16.msra.mxu0 %v1289
        %1450 = vmatpush.bf16.msra.mxu0 %v1286
        %1451 = vmatpush.bf16.msra.mxu0 %v1283
        %1452 = vmatpush.bf16.msra.mxu0 %v1280
        %1453 = vmatpush.bf16.msra.mxu0 %v1277
        %1454 = vmatpush.bf16.msra.mxu0 %v1274
        %1455 = vmatpush.bf16.msra.mxu0 %v1271
        %1456 = vmatmul.bf16.gmra.mxu0 %v1421
        %v1457 = vpop.f32.mrf.mxu0
        %v1458 = vadd.f32 0.0, %v1457
        %v1459 = vpop.f32.mrf.mxu0
        %1460 = vdwg.mxu0
        %v1461 = vadd.f32 %v1418, %v1432
        %v1462 = vxor.u32 %v1461, 2147483648
        %v1463 = vmul.f32 %v1462, 1.442695
        %v1464 = vpow.pop %v1463
        %v1465 = vadd.f32 %v1464, 1.0
        %v1466 = vrcp.pop %v1465
        %v1467 = vmul.f32 %v1465, %v1466
        %v1468 = vsub.f32 1.0, %v1467
        %v1469 = vmul.f32 %v1466, %v1468
        %v1470 = vadd.f32 %v1466, %v1469
        %vm1471 = vweird.f32 %v1465
        %vm1472 = vweird.f32 %v1466
        %vm1473 = vmor %vm1471, %vm1472
        %v1474 = vsel %vm1473, %v1466, %v1470
        %v1475 = vand.u32 2147483647, %v1465
        %vm1476 = vcmp.eq.f32.partialorder %v1475, 8.507059e+37
        %v1477 = vand.u32 %v1465, 2147483648
        %v1478 = vor.u32 1.1754944e-38, %v1477
        %v1479 = vsel %vm1476, %v1478, %v1474
        %v1480 = vmul.f32 1.0, %v1479
        %v1481 = vadd.f32 %v1419, %v1445
        %v1482 = vxor.u32 %v1481, 2147483648
        %v1483 = vmul.f32 %v1482, 1.442695
        %v1484 = vpow.pop %v1483
        %v1485 = vadd.f32 %v1484, 1.0
        %v1486 = vrcp.pop %v1485
        %v1487 = vmul.f32 %v1485, %v1486
        %v1488 = vsub.f32 1.0, %v1487
        %v1489 = vmul.f32 %v1486, %v1488
        %v1490 = vadd.f32 %v1486, %v1489
        %vm1491 = vweird.f32 %v1485
        %vm1492 = vweird.f32 %v1486
        %vm1493 = vmor %vm1491, %vm1492
        %v1494 = vsel %vm1493, %v1486, %v1490
        %v1495 = vand.u32 2147483647, %v1485
        %vm1496 = vcmp.eq.f32.partialorder %v1495, 8.507059e+37
        %v1497 = vand.u32 %v1485, 2147483648
        %v1498 = vor.u32 1.1754944e-38, %v1497
        %v1499 = vsel %vm1496, %v1498, %v1494
        %v1500 = vmul.f32 1.0, %v1499
        %v1501 = vadd.f32 %v1458, %v1397
        %v1502 = vmul.f32 %v1480, %v1501
        %v1503 = vadd.f32 %v1420, %v1502
        %v1504 = vtanh.pop %v1503
        %v1505 = vsub.f32 1.0, %v1500
        %v1506 = vmul.f32 %v1505, %v1504
        %v1507 = vmul.f32 %v1500, %v1406
        %v1508 = vadd.f32 %v1506, %v1507
        %vm1509 = vcmp.eq.s32.totalorder %v1185, 2
        %v1510 = vsel %vm1509, 1, 0
        %1511 = vset.pattern.permute.xlu0 0
        %1512 = vperm.xlu0 %1511, %v1510
        %v1513 = vpop.permute.xlu0 %1512
        %vm1514 = vcmp.eq.s32.totalorder %v1513, 1
        %v1515 = vsel %vm1514, %v1508, %v1413
        %v1516 = vld [vmem:[#allocation2 + $0x8] sm:$0xff]
        %v1517 = vmax.f32 %v1508, 0.0
        %v1518 = vadd.f32 %v1516, %v1517
        %1519 = vst [vmem:[#allocation3 + $0x8] sm:$0xff] %v1518
        %v1520 = vld [vmem:[#allocation4 + $0x30] sm:$0xff]
        %v1521 = vld [vmem:[#allocation4 + $0x38] sm:$0xff]
        %v1522 = vld [vmem:[#allocation4 + $0x40] sm:$0xff]
        %v1523 = vpack.c.bf16 %v1508, %v1508
        %1524 = vmatpush.bf16.msra.mxu0 %v1290
        %1525 = vmatpush.bf16.msra.mxu0 %v1287
        %1526 = vmatpush.bf16.msra.mxu0 %v1284
        %1527 = vmatpush.bf16.msra.mxu0 %v1281
        %1528 = vmatpush.bf16.msra.mxu0 %v1278
        %1529 = vmatpush.bf16.msra.mxu0 %v1275
        %1530 = vmatpush.bf16.msra.mxu0 %v1272
        %1531 = vmatpush.bf16.msra.mxu0 %v1269
        %1532 = vmatmul.bf16.gmra.mxu0 %v1523
        %v1533 = vpop.f32.mrf.mxu0
        %v1534 = vadd.f32 0.0, %v1533
        %v1535 = vpop.f32.mrf.mxu0
        %1536 = vdwg.mxu0
        %1537 = vmatpush.bf16.msra.mxu0 %v1291
        %1538 = vmatpush.bf16.msra.mxu0 %v1288
        %1539 = vmatpush.bf16.msra.mxu0 %v1285
        %1540 = vmatpush.bf16.msra.mxu0 %v1282
        %1541 = vmatpush.bf16.msra.mxu0 %v1279
        %1542 = vmatpush.bf16.msra.mxu0 %v1276
        %1543 = vmatpush.bf16.msra.mxu0 %v1273
        %1544 = vmatpush.bf16.msra.mxu0 %v1270
        %1545 = vmatmul.bf16.gmra.mxu0 %v1523
        %v1546 = vpop.f32.mrf.mxu0
        %v1547 = vadd.f32 0.0, %v1546
        %v1548 = vpop.f32.mrf.mxu0
        %1549 = vdwg.mxu0
        %1550 = vmatpush.bf16.msra.mxu0 %v1292
        %1551 = vmatpush.bf16.msra.mxu0 %v1289
        %1552 = vmatpush.bf16.msra.mxu0 %v1286
        %1553 = vmatpush.bf16.msra.mxu0 %v1283
        %1554 = vmatpush.bf16.msra.mxu0 %v1280
        %1555 = vmatpush.bf16.msra.mxu0 %v1277
        %1556 = vmatpush.bf16.msra.mxu0 %v1274
        %1557 = vmatpush.bf16.msra.mxu0 %v1271
        %1558 = vmatmul.bf16.gmra.mxu0 %v1523
        %v1559 = vpop.f32.mrf.mxu0
        %v1560 = vadd.f32 0.0, %v1559
        %v1561 = vpop.f32.mrf.mxu0
        %1562 = vdwg.mxu0
        %v1563 = vadd.f32 %v1520, %v1534
        %v1564 = vxor.u32 %v1563, 2147483648
        %v1565 = vmul.f32 %v1564, 1.442695
        %v1566 = vpow.pop %v1565
        %v1567 = vadd.f32 %v1566, 1.0
        %v1568 = vrcp.pop %v1567
        %v1569 = vmul.f32 %v1567, %v1568
        %v1570 = vsub.f32 1.0, %v1569
        %v1571 = vmul.f32 %v1568, %v1570
        %v1572 = vadd.f32 %v1568, %v1571
        %vm1573 = vweird.f32 %v1567
        %vm1574 = vweird.f32 %v1568
        %vm1575 = vmor %vm1573, %vm1574
        %v1576 = vsel %vm1575, %v1568, %v1572
        %v1577 = vand.u32 2147483647, %v1567
        %vm1578 = vcmp.eq.f32.partialorder %v1577, 8.507059e+37
        %v1579 = vand.u32 %v1567, 2147483648
        %v1580 = vor.u32 1.1754944e-38, %v1579
        %v1581 = vsel %vm1578, %v1580, %v1576
        %v1582 = vmul.f32 1.0, %v1581
        %v1583 = vadd.f32 %v1521, %v1547
        %v1584 = vxor.u32 %v1583, 2147483648
        %v1585 = vmul.f32 %v1584, 1.442695
        %v1586 = vpow.pop %v1585
        %v1587 = vadd.f32 %v1586, 1.0
        %v1588 = vrcp.pop %v1587
        %v1589 = vmul.f32 %v1587, %v1588
        %v1590 = vsub.f32 1.0, %v1589
        %v1591 = vmul.f32 %v1588, %v1590
        %v1592 = vadd.f32 %v1588, %v1591
        %vm1593 = vweird.f32 %v1587
        %vm1594 = vweird.f32 %v1588
        %vm1595 = vmor %vm1593, %vm1594
        %v1596 = vsel %vm1595, %v1588, %v1592
        %v1597 = vand.u32 2147483647, %v1587
        %vm1598 = vcmp.eq.f32.partialorder %v1597, 8.507059e+37
        %v1599 = vand.u32 %v1587, 2147483648
        %v1600 = vor.u32 1.1754944e-38, %v1599
        %v1601 = vsel %vm1598, %v1600, %v1596
        %v1602 = vmul.f32 1.0, %v1601
        %v1603 = vadd.f32 %v1560, %v1397
        %v1604 = vmul.f32 %v1582, %v1603
        %v1605 = vadd.f32 %v1522, %v1604
        %v1606 = vtanh.pop %v1605
        %v1607 = vsub.f32 1.0, %v1602
        %v1608 = vmul.f32 %v1607, %v1606
        %v1609 = vmul.f32 %v1602, %v1508
        %v1610 = vadd.f32 %v1608, %v1609
        %vm1611 = vcmp.eq.s32.totalorder %v1185, 3
        %v1612 = vsel %vm1611, 1, 0
        %1613 = vset.pattern.permute.xlu0 0
        %1614 = vperm.xlu0 %1613, %v1612
        %v1615 = vpop.permute.xlu0 %1614
        %vm1616 = vcmp.eq.s32.totalorder %v1615, 1
        %v1617 = vsel %vm1616, %v1610, %v1515
        %v1618 = vld [vmem:[#allocation2 + $0x10] sm:$0xff]
        %v1619 = vmax.f32 %v1610, 0.0
        %v1620 = vadd.f32 %v1618, %v1619
        %1621 = vst [vmem:[#allocation3 + $0x10] sm:$0xff] %v1620
        %v1622 = vld [vmem:[#allocation4 + $0x48] sm:$0xff]
        %v1623 = vld [vmem:[#allocation4 + $0x50] sm:$0xff]
        %v1624 = vld [vmem:[#allocation4 + $0x58] sm:$0xff]
        %v1625 = vpack.c.bf16 %v1610, %v1610
        %1626 = vmatpush.bf16.msra.mxu0 %v1290
        %1627 = vmatpush.bf16.msra.mxu0 %v1287
        %1628 = vmatpush.bf16.msra.mxu0 %v1284
        %1629 = vmatpush.bf16.msra.mxu0 %v1281
        %1630 = vmatpush.bf16.msra.mxu0 %v1278
        %1631 = vmatpush.bf16.msra.mxu0 %v1275
        %1632 = vmatpush.bf16.msra.mxu0 %v1272
        %1633 = vmatpush.bf16.msra.mxu0 %v1269
        %1634 = vmatmul.bf16.gmra.mxu0 %v1625
        %v1635 = vpop.f32.mrf.mxu0
        %v1636 = vadd.f32 0.0, %v1635
        %v1637 = vpop.f32.mrf.mxu0
        %1638 = vdwg.mxu0
        %1639 = vmatpush.bf16.msra.mxu0 %v1291
        %1640 = vmatpush.bf16.msra.mxu0 %v1288
        %1641 = vmatpush.bf16.msra.mxu0 %v1285
        %1642 = vmatpush.bf16.msra.mxu0 %v1282
        %1643 = vmatpush.bf16.msra.mxu0 %v1279
        %1644 = vmatpush.bf16.msra.mxu0 %v1276
        %1645 = vmatpush.bf16.msra.mxu0 %v1273
        %1646 = vmatpush.bf16.msra.mxu0 %v1270
        %1647 = vmatmul.bf16.gmra.mxu0 %v1625
        %v1648 = vpop.f32.mrf.mxu0
        %v1649 = vadd.f32 0.0, %v1648
        %v1650 = vpop.f32.mrf.mxu0
        %1651 = vdwg.mxu0
        %1652 = vmatpush.bf16.msra.mxu0 %v1292
        %1653 = vmatpush.bf16.msra.mxu0 %v1289
        %1654 = vmatpush.bf16.msra.mxu0 %v1286
        %1655 = vmatpush.bf16.msra.mxu0 %v1283
        %1656 = vmatpush.bf16.msra.mxu0 %v1280
        %1657 = vmatpush.bf16.msra.mxu0 %v1277
        %1658 = vmatpush.bf16.msra.mxu0 %v1274
        %1659 = vmatpush.bf16.msra.mxu0 %v1271
        %1660 = vmatmul.bf16.gmra.mxu0 %v1625
        %v1661 = vpop.f32.mrf.mxu0
        %v1662 = vadd.f32 0.0, %v1661
        %v1663 = vpop.f32.mrf.mxu0
        %1664 = vdwg.mxu0
        %v1665 = vadd.f32 %v1622, %v1636
        %v1666 = vxor.u32 %v1665, 2147483648
        %v1667 = vmul.f32 %v1666, 1.442695
        %v1668 = vpow.pop %v1667
        %v1669 = vadd.f32 %v1668, 1.0
        %v1670 = vrcp.pop %v1669
        %v1671 = vmul.f32 %v1669, %v1670
        %v1672 = vsub.f32 1.0, %v1671
        %v1673 = vmul.f32 %v1670, %v1672
        %v1674 = vadd.f32 %v1670, %v1673
        %vm1675 = vweird.f32 %v1669
        %vm1676 = vweird.f32 %v1670
        %vm1677 = vmor %vm1675, %vm1676
        %v1678 = vsel %vm1677, %v1670, %v1674
        %v1679 = vand.u32 2147483647, %v1669
        %vm1680 = vcmp.eq.f32.partialorder %v1679, 8.507059e+37
        %v1681 = vand.u32 %v1669, 2147483648
        %v1682 = vor.u32 1.1754944e-38, %v1681
        %v1683 = vsel %vm1680, %v1682, %v1678
        %v1684 = vmul.f32 1.0, %v1683
        %v1685 = vadd.f32 %v1623, %v1649
        %v1686 = vxor.u32 %v1685, 2147483648
        %v1687 = vmul.f32 %v1686, 1.442695
        %v1688 = vpow.pop %v1687
        %v1689 = vadd.f32 %v1688, 1.0
        %v1690 = vrcp.pop %v1689
        %v1691 = vmul.f32 %v1689, %v1690
        %v1692 = vsub.f32 1.0, %v1691
        %v1693 = vmul.f32 %v1690, %v1692
        %v1694 = vadd.f32 %v1690, %v1693
        %vm1695 = vweird.f32 %v1689
        %vm1696 = vweird.f32 %v1690
        %vm1697 = vmor %vm1695, %vm1696
        %v1698 = vsel %vm1697, %v1690, %v1694
        %v1699 = vand.u32 2147483647, %v1689
        %vm1700 = vcmp.eq.f32.partialorder %v1699, 8.507059e+37
        %v1701 = vand.u32 %v1689, 2147483648
        %v1702 = vor.u32 1.1754944e-38, %v1701
        %v1703 = vsel %vm1700, %v1702, %v1698
        %v1704 = vmul.f32 1.0, %v1703
        %v1705 = vadd.f32 %v1662, %v1397
        %v1706 = vmul.f32 %v1684, %v1705
        %v1707 = vadd.f32 %v1624, %v1706
        %v1708 = vtanh.pop %v1707
        %v1709 = vsub.f32 1.0, %v1704
        %v1710 = vmul.f32 %v1709, %v1708
        %v1711 = vmul.f32 %v1704, %v1610
        %v1712 = vadd.f32 %v1710, %v1711
        %vm1713 = vcmp.eq.s32.totalorder %v1185, 4
        %v1714 = vsel %vm1713, 1, 0
        %1715 = vset.pattern.permute.xlu0 0
        %1716 = vperm.xlu0 %1715, %v1714
        %v1717 = vpop.permute.xlu0 %1716
        %vm1718 = vcmp.eq.s32.totalorder %v1717, 1
        %v1719 = vsel %vm1718, %v1712, %v1617
        %v1720 = vld [vmem:[#allocation2 + $0x18] sm:$0xff]
        %v1721 = vmax.f32 %v1712, 0.0
        %v1722 = vadd.f32 %v1720, %v1721
        %1723 = vst [vmem:[#allocation3 + $0x18] sm:$0xff] %v1722
        %v1724 = vld [vmem:[#allocation4 + $0x60] sm:$0xff]
        %v1725 = vld [vmem:[#allocation4 + $0x68] sm:$0xff]
        %v1726 = vld [vmem:[#allocation4 + $0x70] sm:$0xff]
        %v1727 = vpack.c.bf16 %v1712, %v1712
        %1728 = vmatpush.bf16.msra.mxu0 %v1290
        %1729 = vmatpush.bf16.msra.mxu0 %v1287
        %1730 = vmatpush.bf16.msra.mxu0 %v1284
        %1731 = vmatpush.bf16.msra.mxu0 %v1281
        %1732 = vmatpush.bf16.msra.mxu0 %v1278
        %1733 = vmatpush.bf16.msra.mxu0 %v1275
        %1734 = vmatpush.bf16.msra.mxu0 %v1272
        %1735 = vmatpush.bf16.msra.mxu0 %v1269
        %1736 = vmatmul.bf16.gmra.mxu0 %v1727
        %v1737 = vpop.f32.mrf.mxu0
        %v1738 = vadd.f32 0.0, %v1737
        %v1739 = vpop.f32.mrf.mxu0
        %1740 = vdwg.mxu0
        %1741 = vmatpush.bf16.msra.mxu0 %v1291
        %1742 = vmatpush.bf16.msra.mxu0 %v1288
        %1743 = vmatpush.bf16.msra.mxu0 %v1285
        %1744 = vmatpush.bf16.msra.mxu0 %v1282
        %1745 = vmatpush.bf16.msra.mxu0 %v1279
        %1746 = vmatpush.bf16.msra.mxu0 %v1276
        %1747 = vmatpush.bf16.msra.mxu0 %v1273
        %1748 = vmatpush.bf16.msra.mxu0 %v1270
        %1749 = vmatmul.bf16.gmra.mxu0 %v1727
        %v1750 = vpop.f32.mrf.mxu0
        %v1751 = vadd.f32 0.0, %v1750
        %v1752 = vpop.f32.mrf.mxu0
        %1753 = vdwg.mxu0
        %1754 = vmatpush.bf16.msra.mxu0 %v1292
        %1755 = vmatpush.bf16.msra.mxu0 %v1289
        %1756 = vmatpush.bf16.msra.mxu0 %v1286
        %1757 = vmatpush.bf16.msra.mxu0 %v1283
        %1758 = vmatpush.bf16.msra.mxu0 %v1280
        %1759 = vmatpush.bf16.msra.mxu0 %v1277
        %1760 = vmatpush.bf16.msra.mxu0 %v1274
        %1761 = vmatpush.bf16.msra.mxu0 %v1271
        %1762 = vmatmul.bf16.gmra.mxu0 %v1727
        %v1763 = vpop.f32.mrf.mxu0
        %v1764 = vadd.f32 0.0, %v1763
        %v1765 = vpop.f32.mrf.mxu0
        %1766 = vdwg.mxu0
        %v1767 = vadd.f32 %v1724, %v1738
        %v1768 = vxor.u32 %v1767, 2147483648
        %v1769 = vmul.f32 %v1768, 1.442695
        %v1770 = vpow.pop %v1769
        %v1771 = vadd.f32 %v1770, 1.0
        %v1772 = vrcp.pop %v1771
        %v1773 = vmul.f32 %v1771, %v1772
        %v1774 = vsub.f32 1.0, %v1773
        %v1775 = vmul.f32 %v1772, %v1774
        %v1776 = vadd.f32 %v1772, %v1775
        %vm1777 = vweird.f32 %v1771
        %vm1778 = vweird.f32 %v1772
        %vm1779 = vmor %vm1777, %vm1778
        %v1780 = vsel %vm1779, %v1772, %v1776
        %v1781 = vand.u32 2147483647, %v1771
        %vm1782 = vcmp.eq.f32.partialorder %v1781, 8.507059e+37
        %v1783 = vand.u32 %v1771, 2147483648
        %v1784 = vor.u32 1.1754944e-38, %v1783
        %v1785 = vsel %vm1782, %v1784, %v1780
        %v1786 = vmul.f32 1.0, %v1785
        %v1787 = vadd.f32 %v1725, %v1751
        %v1788 = vxor.u32 %v1787, 2147483648
        %v1789 = vmul.f32 %v1788, 1.442695
        %v1790 = vpow.pop %v1789
        %v1791 = vadd.f32 %v1790, 1.0
        %v1792 = vrcp.pop %v1791
        %v1793 = vmul.f32 %v1791, %v1792
        %v1794 = vsub.f32 1.0, %v1793
        %v1795 = vmul.f32 %v1792, %v1794
        %v1796 = vadd.f32 %v1792, %v1795
        %vm1797 = vweird.f32 %v1791
        %vm1798 = vweird.f32 %v1792
        %vm1799 = vmor %vm1797, %vm1798
        %v1800 = vsel %vm1799, %v1792, %v1796
        %v1801 = vand.u32 2147483647, %v1791
        %vm1802 = vcmp.eq.f32.partialorder %v1801, 8.507059e+37
        %v1803 = vand.u32 %v1791, 2147483648
        %v1804 = vor.u32 1.1754944e-38, %v1803
        %v1805 = vsel %vm1802, %v1804, %v1800
        %v1806 = vmul.f32 1.0, %v1805
        %v1807 = vadd.f32 %v1764, %v1397
        %v1808 = vmul.f32 %v1786, %v1807
        %v1809 = vadd.f32 %v1726, %v1808
        %v1810 = vtanh.pop %v1809
        %v1811 = vsub.f32 1.0, %v1806
        %v1812 = vmul.f32 %v1811, %v1810
        %v1813 = vmul.f32 %v1806, %v1712
        %v1814 = vadd.f32 %v1812, %v1813
        %vm1815 = vcmp.eq.s32.totalorder %v1185, 5
        %v1816 = vsel %vm1815, 1, 0
        %1817 = vset.pattern.permute.xlu0 0
        %1818 = vperm.xlu0 %1817, %v1816
        %v1819 = vpop.permute.xlu0 %1818
        %vm1820 = vcmp.eq.s32.totalorder %v1819, 1
        %v1821 = vsel %vm1820, %v1814, %v1719
        %v1822 = vld [vmem:[#allocation2 + $0x20] sm:$0xff]
        %v1823 = vmax.f32 %v1814, 0.0
        %v1824 = vadd.f32 %v1822, %v1823
        %1825 = vst [vmem:[#allocation3 + $0x20] sm:$0xff] %v1824
        %v1826 = vld [vmem:[#allocation4 + $0x78] sm:$0xff]
        %v1827 = vld [vmem:[#allocation4 + $0x80] sm:$0xff]
        %v1828 = vld [vmem:[#allocation4 + $0x88] sm:$0xff]
        %v1829 = vpack.c.bf16 %v1814, %v1814
        %1830 = vmatpush.bf16.msra.mxu0 %v1290
        %1831 = vmatpush.bf16.msra.mxu0 %v1287
        %1832 = vmatpush.bf16.msra.mxu0 %v1284
        %1833 = vmatpush.bf16.msra.mxu0 %v1281
        %1834 = vmatpush.bf16.msra.mxu0 %v1278
        %1835 = vmatpush.bf16.msra.mxu0 %v1275
        %1836 = vmatpush.bf16.msra.mxu0 %v1272
        %1837 = vmatpush.bf16.msra.mxu0 %v1269
        %1838 = vmatmul.bf16.gmra.mxu0 %v1829
        %v1839 = vpop.f32.mrf.mxu0
        %v1840 = vadd.f32 0.0, %v1839
        %v1841 = vpop.f32.mrf.mxu0
        %1842 = vdwg.mxu0
        %1843 = vmatpush.bf16.msra.mxu0 %v1291
        %1844 = vmatpush.bf16.msra.mxu0 %v1288
        %1845 = vmatpush.bf16.msra.mxu0 %v1285
        %1846 = vmatpush.bf16.msra.mxu0 %v1282
        %1847 = vmatpush.bf16.msra.mxu0 %v1279
        %1848 = vmatpush.bf16.msra.mxu0 %v1276
        %1849 = vmatpush.bf16.msra.mxu0 %v1273
        %1850 = vmatpush.bf16.msra.mxu0 %v1270
        %1851 = vmatmul.bf16.gmra.mxu0 %v1829
        %v1852 = vpop.f32.mrf.mxu0
        %v1853 = vadd.f32 0.0, %v1852
        %v1854 = vpop.f32.mrf.mxu0
        %1855 = vdwg.mxu0
        %1856 = vmatpush.bf16.msra.mxu0 %v1292
        %1857 = vmatpush.bf16.msra.mxu0 %v1289
        %1858 = vmatpush.bf16.msra.mxu0 %v1286
        %1859 = vmatpush.bf16.msra.mxu0 %v1283
        %1860 = vmatpush.bf16.msra.mxu0 %v1280
        %1861 = vmatpush.bf16.msra.mxu0 %v1277
        %1862 = vmatpush.bf16.msra.mxu0 %v1274
        %1863 = vmatpush.bf16.msra.mxu0 %v1271
        %1864 = vmatmul.bf16.gmra.mxu0 %v1829
        %v1865 = vpop.f32.mrf.mxu0
        %v1866 = vadd.f32 0.0, %v1865
        %v1867 = vpop.f32.mrf.mxu0
        %1868 = vdwg.mxu0
        %v1869 = vadd.f32 %v1826, %v1840
        %v1870 = vxor.u32 %v1869, 2147483648
        %v1871 = vmul.f32 %v1870, 1.442695
        %v1872 = vpow.pop %v1871
        %v1873 = vadd.f32 %v1872, 1.0
        %v1874 = vrcp.pop %v1873
        %v1875 = vmul.f32 %v1873, %v1874
        %v1876 = vsub.f32 1.0, %v1875
        %v1877 = vmul.f32 %v1874, %v1876
        %v1878 = vadd.f32 %v1874, %v1877
        %vm1879 = vweird.f32 %v1873
        %vm1880 = vweird.f32 %v1874
        %vm1881 = vmor %vm1879, %vm1880
        %v1882 = vsel %vm1881, %v1874, %v1878
        %v1883 = vand.u32 2147483647, %v1873
        %vm1884 = vcmp.eq.f32.partialorder %v1883, 8.507059e+37
        %v1885 = vand.u32 %v1873, 2147483648
        %v1886 = vor.u32 1.1754944e-38, %v1885
        %v1887 = vsel %vm1884, %v1886, %v1882
        %v1888 = vmul.f32 1.0, %v1887
        %v1889 = vadd.f32 %v1827, %v1853
        %v1890 = vxor.u32 %v1889, 2147483648
        %v1891 = vmul.f32 %v1890, 1.442695
        %v1892 = vpow.pop %v1891
        %v1893 = vadd.f32 %v1892, 1.0
        %v1894 = vrcp.pop %v1893
        %v1895 = vmul.f32 %v1893, %v1894
        %v1896 = vsub.f32 1.0, %v1895
        %v1897 = vmul.f32 %v1894, %v1896
        %v1898 = vadd.f32 %v1894, %v1897
        %vm1899 = vweird.f32 %v1893
        %vm1900 = vweird.f32 %v1894
        %vm1901 = vmor %vm1899, %vm1900
        %v1902 = vsel %vm1901, %v1894, %v1898
        %v1903 = vand.u32 2147483647, %v1893
        %vm1904 = vcmp.eq.f32.partialorder %v1903, 8.507059e+37
        %v1905 = vand.u32 %v1893, 2147483648
        %v1906 = vor.u32 1.1754944e-38, %v1905
        %v1907 = vsel %vm1904, %v1906, %v1902
        %v1908 = vmul.f32 1.0, %v1907
        %v1909 = vadd.f32 %v1866, %v1397
        %v1910 = vmul.f32 %v1888, %v1909
        %v1911 = vadd.f32 %v1828, %v1910
        %v1912 = vtanh.pop %v1911
        %v1913 = vsub.f32 1.0, %v1908
        %v1914 = vmul.f32 %v1913, %v1912
        %v1915 = vmul.f32 %v1908, %v1814
        %v1916 = vadd.f32 %v1914, %v1915
        %vm1917 = vcmp.eq.s32.totalorder %v1185, 6
        %v1918 = vsel %vm1917, 1, 0
        %1919 = vset.pattern.permute.xlu0 0
        %1920 = vperm.xlu0 %1919, %v1918
        %v1921 = vpop.permute.xlu0 %1920
        %vm1922 = vcmp.eq.s32.totalorder %v1921, 1
        %v1923 = vsel %vm1922, %v1916, %v1821
        %v1924 = vld [vmem:[#allocation2 + $0x28] sm:$0xff]
        %v1925 = vmax.f32 %v1916, 0.0
        %v1926 = vadd.f32 %v1924, %v1925
        %1927 = vst [vmem:[#allocation3 + $0x28] sm:$0xff] %v1926
        %v1928 = vld [vmem:[#allocation4 + $0x90] sm:$0xff]
        %v1929 = vld [vmem:[#allocation4 + $0x98] sm:$0xff]
        %v1930 = vld [vmem:[#allocation4 + $0xa0] sm:$0xff]
        %v1931 = vpack.c.bf16 %v1916, %v1916
        %1932 = vmatpush.bf16.msra.mxu0 %v1290
        %1933 = vmatpush.bf16.msra.mxu0 %v1287
        %1934 = vmatpush.bf16.msra.mxu0 %v1284
        %1935 = vmatpush.bf16.msra.mxu0 %v1281
        %1936 = vmatpush.bf16.msra.mxu0 %v1278
        %1937 = vmatpush.bf16.msra.mxu0 %v1275
        %1938 = vmatpush.bf16.msra.mxu0 %v1272
        %1939 = vmatpush.bf16.msra.mxu0 %v1269
        %1940 = vmatmul.bf16.gmra.mxu0 %v1931
        %v1941 = vpop.f32.mrf.mxu0
        %v1942 = vadd.f32 0.0, %v1941
        %v1943 = vpop.f32.mrf.mxu0
        %1944 = vdwg.mxu0
        %1945 = vmatpush.bf16.msra.mxu0 %v1291
        %1946 = vmatpush.bf16.msra.mxu0 %v1288
        %1947 = vmatpush.bf16.msra.mxu0 %v1285
        %1948 = vmatpush.bf16.msra.mxu0 %v1282
        %1949 = vmatpush.bf16.msra.mxu0 %v1279
        %1950 = vmatpush.bf16.msra.mxu0 %v1276
        %1951 = vmatpush.bf16.msra.mxu0 %v1273
        %1952 = vmatpush.bf16.msra.mxu0 %v1270
        %1953 = vmatmul.bf16.gmra.mxu0 %v1931
        %v1954 = vpop.f32.mrf.mxu0
        %v1955 = vadd.f32 0.0, %v1954
        %v1956 = vpop.f32.mrf.mxu0
        %1957 = vdwg.mxu0
        %1958 = vmatpush.bf16.msra.mxu0 %v1292
        %1959 = vmatpush.bf16.msra.mxu0 %v1289
        %1960 = vmatpush.bf16.msra.mxu0 %v1286
        %1961 = vmatpush.bf16.msra.mxu0 %v1283
        %1962 = vmatpush.bf16.msra.mxu0 %v1280
        %1963 = vmatpush.bf16.msra.mxu0 %v1277
        %1964 = vmatpush.bf16.msra.mxu0 %v1274
        %1965 = vmatpush.bf16.msra.mxu0 %v1271
        %1966 = vmatmul.bf16.gmra.mxu0 %v1931
        %v1967 = vpop.f32.mrf.mxu0
        %v1968 = vadd.f32 0.0, %v1967
        %v1969 = vpop.f32.mrf.mxu0
        %1970 = vdwg.mxu0
        %v1971 = vadd.f32 %v1928, %v1942
        %v1972 = vxor.u32 %v1971, 2147483648
        %v1973 = vmul.f32 %v1972, 1.442695
        %v1974 = vpow.pop %v1973
        %v1975 = vadd.f32 %v1974, 1.0
        %v1976 = vrcp.pop %v1975
        %v1977 = vmul.f32 %v1975, %v1976
        %v1978 = vsub.f32 1.0, %v1977
        %v1979 = vmul.f32 %v1976, %v1978
        %v1980 = vadd.f32 %v1976, %v1979
        %vm1981 = vweird.f32 %v1975
        %vm1982 = vweird.f32 %v1976
        %vm1983 = vmor %vm1981, %vm1982
        %v1984 = vsel %vm1983, %v1976, %v1980
        %v1985 = vand.u32 2147483647, %v1975
        %vm1986 = vcmp.eq.f32.partialorder %v1985, 8.507059e+37
        %v1987 = vand.u32 %v1975, 2147483648
        %v1988 = vor.u32 1.1754944e-38, %v1987
        %v1989 = vsel %vm1986, %v1988, %v1984
        %v1990 = vmul.f32 1.0, %v1989
        %v1991 = vadd.f32 %v1929, %v1955
        %v1992 = vxor.u32 %v1991, 2147483648
        %v1993 = vmul.f32 %v1992, 1.442695
        %v1994 = vpow.pop %v1993
        %v1995 = vadd.f32 %v1994, 1.0
        %v1996 = vrcp.pop %v1995
        %v1997 = vmul.f32 %v1995, %v1996
        %v1998 = vsub.f32 1.0, %v1997
        %v1999 = vmul.f32 %v1996, %v1998
        %v2000 = vadd.f32 %v1996, %v1999
        %vm2001 = vweird.f32 %v1995
        %vm2002 = vweird.f32 %v1996
        %vm2003 = vmor %vm2001, %vm2002
        %v2004 = vsel %vm2003, %v1996, %v2000
        %v2005 = vand.u32 2147483647, %v1995
        %vm2006 = vcmp.eq.f32.partialorder %v2005, 8.507059e+37
        %v2007 = vand.u32 %v1995, 2147483648
        %v2008 = vor.u32 1.1754944e-38, %v2007
        %v2009 = vsel %vm2006, %v2008, %v2004
        %v2010 = vmul.f32 1.0, %v2009
        %v2011 = vadd.f32 %v1968, %v1397
        %v2012 = vmul.f32 %v1990, %v2011
        %v2013 = vadd.f32 %v1930, %v2012
        %v2014 = vtanh.pop %v2013
        %v2015 = vsub.f32 1.0, %v2010
        %v2016 = vmul.f32 %v2015, %v2014
        %v2017 = vmul.f32 %v2010, %v1916
        %v2018 = vadd.f32 %v2016, %v2017
        %vm2019 = vcmp.eq.s32.totalorder %v1185, 7
        %v2020 = vsel %vm2019, 1, 0
        %2021 = vset.pattern.permute.xlu0 0
        %2022 = vperm.xlu0 %2021, %v2020
        %v2023 = vpop.permute.xlu0 %2022
        %vm2024 = vcmp.eq.s32.totalorder %v2023, 1
        %v2025 = vsel %vm2024, %v2018, %v1923
        %v2026 = vld [vmem:[#allocation2 + $0x30] sm:$0xff]
        %v2027 = vmax.f32 %v2018, 0.0
        %v2028 = vadd.f32 %v2026, %v2027
        %2029 = vst [vmem:[#allocation3 + $0x30] sm:$0xff] %v2028
        %v2030 = vld [vmem:[#allocation4 + $0xa8] sm:$0xff]
        %v2031 = vld [vmem:[#allocation4 + $0xb0] sm:$0xff]
        %v2032 = vld [vmem:[#allocation4 + $0xb8] sm:$0xff]
        %v2033 = vpack.c.bf16 %v2018, %v2018
        %2034 = vmatpush.bf16.msra.mxu0 %v1290
        %2035 = vmatpush.bf16.msra.mxu0 %v1287
        %2036 = vmatpush.bf16.msra.mxu0 %v1284
        %2037 = vmatpush.bf16.msra.mxu0 %v1281
        %2038 = vmatpush.bf16.msra.mxu0 %v1278
        %2039 = vmatpush.bf16.msra.mxu0 %v1275
        %2040 = vmatpush.bf16.msra.mxu0 %v1272
        %2041 = vmatpush.bf16.msra.mxu0 %v1269
        %2042 = vmatmul.bf16.gmra.mxu0 %v2033
        %v2043 = vpop.f32.mrf.mxu0
        %v2044 = vadd.f32 0.0, %v2043
        %v2045 = vpop.f32.mrf.mxu0
        %2046 = vdwg.mxu0
        %2047 = vmatpush.bf16.msra.mxu0 %v1291
        %2048 = vmatpush.bf16.msra.mxu0 %v1288
        %2049 = vmatpush.bf16.msra.mxu0 %v1285
        %2050 = vmatpush.bf16.msra.mxu0 %v1282
        %2051 = vmatpush.bf16.msra.mxu0 %v1279
        %2052 = vmatpush.bf16.msra.mxu0 %v1276
        %2053 = vmatpush.bf16.msra.mxu0 %v1273
        %2054 = vmatpush.bf16.msra.mxu0 %v1270
        %2055 = vmatmul.bf16.gmra.mxu0 %v2033
        %v2056 = vpop.f32.mrf.mxu0
        %v2057 = vadd.f32 0.0, %v2056
        %v2058 = vpop.f32.mrf.mxu0
        %2059 = vdwg.mxu0
        %2060 = vmatpush.bf16.msra.mxu0 %v1292
        %2061 = vmatpush.bf16.msra.mxu0 %v1289
        %2062 = vmatpush.bf16.msra.mxu0 %v1286
        %2063 = vmatpush.bf16.msra.mxu0 %v1283
        %2064 = vmatpush.bf16.msra.mxu0 %v1280
        %2065 = vmatpush.bf16.msra.mxu0 %v1277
        %2066 = vmatpush.bf16.msra.mxu0 %v1274
        %2067 = vmatpush.bf16.msra.mxu0 %v1271
        %2068 = vmatmul.bf16.gmra.mxu0 %v2033
        %v2069 = vpop.f32.mrf.mxu0
        %v2070 = vadd.f32 0.0, %v2069
        %v2071 = vpop.f32.mrf.mxu0
        %2072 = vdwg.mxu0
        %v2073 = vadd.f32 %v2030, %v2044
        %v2074 = vxor.u32 %v2073, 2147483648
        %v2075 = vmul.f32 %v2074, 1.442695
        %v2076 = vpow.pop %v2075
        %v2077 = vadd.f32 %v2076, 1.0
        %v2078 = vrcp.pop %v2077
        %v2079 = vmul.f32 %v2077, %v2078
        %v2080 = vsub.f32 1.0, %v2079
        %v2081 = vmul.f32 %v2078, %v2080
        %v2082 = vadd.f32 %v2078, %v2081
        %vm2083 = vweird.f32 %v2077
        %vm2084 = vweird.f32 %v2078
        %vm2085 = vmor %vm2083, %vm2084
        %v2086 = vsel %vm2085, %v2078, %v2082
        %v2087 = vand.u32 2147483647, %v2077
        %vm2088 = vcmp.eq.f32.partialorder %v2087, 8.507059e+37
        %v2089 = vand.u32 %v2077, 2147483648
        %v2090 = vor.u32 1.1754944e-38, %v2089
        %v2091 = vsel %vm2088, %v2090, %v2086
        %v2092 = vmul.f32 1.0, %v2091
        %v2093 = vadd.f32 %v2031, %v2057
        %v2094 = vxor.u32 %v2093, 2147483648
        %v2095 = vmul.f32 %v2094, 1.442695
        %v2096 = vpow.pop %v2095
        %v2097 = vadd.f32 %v2096, 1.0
        %v2098 = vrcp.pop %v2097
        %v2099 = vmul.f32 %v2097, %v2098
        %v2100 = vsub.f32 1.0, %v2099
        %v2101 = vmul.f32 %v2098, %v2100
        %v2102 = vadd.f32 %v2098, %v2101
        %vm2103 = vweird.f32 %v2097
        %vm2104 = vweird.f32 %v2098
        %vm2105 = vmor %vm2103, %vm2104
        %v2106 = vsel %vm2105, %v2098, %v2102
        %v2107 = vand.u32 2147483647, %v2097
        %vm2108 = vcmp.eq.f32.partialorder %v2107, 8.507059e+37
        %v2109 = vand.u32 %v2097, 2147483648
        %v2110 = vor.u32 1.1754944e-38, %v2109
        %v2111 = vsel %vm2108, %v2110, %v2106
        %v2112 = vmul.f32 1.0, %v2111
        %v2113 = vadd.f32 %v2070, %v1397
        %v2114 = vmul.f32 %v2092, %v2113
        %v2115 = vadd.f32 %v2032, %v2114
        %v2116 = vtanh.pop %v2115
        %v2117 = vsub.f32 1.0, %v2112
        %v2118 = vmul.f32 %v2117, %v2116
        %v2119 = vmul.f32 %v2112, %v2018
        %v2120 = vadd.f32 %v2118, %v2119
        %vm2121 = vcmp.eq.s32.totalorder %v1185, 8
        %v2122 = vsel %vm2121, 1, 0
        %2123 = vset.pattern.permute.xlu0 0
        %2124 = vperm.xlu0 %2123, %v2122
        %v2125 = vpop.permute.xlu0 %2124
        %vm2126 = vcmp.eq.s32.totalorder %v2125, 1
        %v2127 = vsel %vm2126, %v2120, %v2025
        %v2128 = vld [vmem:[#allocation2 + $0x38] sm:$0xff]
        %v2129 = vmax.f32 %v2120, 0.0
        %v2130 = vadd.f32 %v2128, %v2129
        %2131 = vst [vmem:[#allocation3 + $0x38] sm:$0xff] %v2130
        %p2132 = scmp.eq.s32.totalorder %s26, 1
        // Predicated region
        $region89: #{tpu_custom_call.1} parent=67 // pred_check
          %p2133 = pneg %p2132
        $region90: #{tpu_custom_call.1} parent=67 // pred_check_branch
          %2135 = sbr.rel (%p2133) target = $region92
        $region91: #{tpu_custom_call.1} parent=67 // pred_region
          %v2136 = vtanh.pop %v2127
          %2137 = vst [vmem:[#allocation12] sm:$0xff] %v2136
        $region92: #{tpu_custom_call.1} parent=67 // pred_fallthru
          _
        // Predicated region
        $region93: #{tpu_custom_call.1} parent=67 // pred_check
          %p2138 = pneg %p311
        $region94: #{tpu_custom_call.1} parent=67 // pred_check_branch
          %2140 = sbr.rel (%p2138) target = $region96
        $region95: #{tpu_custom_call.1} parent=67 // pred_region
          %2142 = vsyncadd [#allocation7], 0
          %s2144 = sshll.u32 [#allocation12], 4
          %s2145 = int_to_ptr.vmem [resolvable:$true] %s2144
          %s2146 = sshll.u32 %s12, 4
          %s2147 = int_to_ptr.hbm [resolvable:$true] %s2146
          %2149 = dma.vmem_to_hbm [thread:$0]  %s2145, 128, %s2147, [#allocation7]
        $region96: #{tpu_custom_call.1} parent=67 // pred_fallthru
          _
        // Predicated region
        $region97: #{tpu_custom_call.1} parent=67 // pred_check
          %p2150 = pneg %p311
        $region98: #{tpu_custom_call.1} parent=67 // pred_check_branch
          %2152 = sbr.rel (%p2150) target = $region100
        $region99: #{tpu_custom_call.1} parent=67 // pred_region
          %2154 = dma.done [#allocation7], 128
        $region100: #{tpu_custom_call.1} parent=67 // pred_fallthru
          _
      $region68: #{tpu_custom_call.1} parent=5 // pred_fallthru
        _
      %p2155 = scmp.le.s32.totalorder 2, %s21
      // Predicated region
      $region101: #{tpu_custom_call.1} parent=5 // pred_check
        %p2156 = pneg %p2155
      $region102: #{tpu_custom_call.1} parent=5 // pred_check_branch
        %2158 = sbr.rel (%p2156) target = $region104
      $region103: #{tpu_custom_call.1} parent=5 // pred_region
        %s2159 = ssub.s32 %s21, 2
      $region104: #{tpu_custom_call.1} parent=5 // pred_fallthru
        _
    $region6: #{tpu_custom_call.1} parent=1 // loop_footer
      %s25 = sadd.s32 1, %s21
    $region7: #{tpu_custom_call.1} parent=1 // loop_footer_branch
      %20 = sbr.rel target = $region3
    $region8: #{tpu_custom_call.1} parent=1 // loop_exit
      _
    %2160 = vsyncpa [#allocation6], 1
    %s2161 = scalar_lea.sflag [#allocation6], 1
    %2162 = vsyncpa %s2161, 1
    %2163 = vsyncpa [#allocation9], 1
    %2164 = vsyncpa [#allocation7], 1
    %s2165 = scalar_lea.sflag [#allocation7], 1
    %2166 = vsyncpa %s2165, 1

</llo_original>
